<compile_context>
chip_gen: v6e
topology: v6e:2x2x1
jax: 0.10.0
libtpu: 0.0.40
codegen_flags: <defaults>
</compile_context>

<pallas_src>
import functools

import jax
import jax.numpy as jnp
from jax.experimental import pallas as pl
from jax.experimental.pallas import tpu as pltpu


# ----------------------------- Pallas kernel -------------------------------


def _fused_lstm_fc_kernel(x_ref, *refs, num_layers, seq_len, batch_pad,
                          hidden_size):
    """Fused multi-layer LSTM + final Linear, single grid step.

    refs = [w_ih_0, w_hh_0, b_0, ..., w_ih_{L-1}, w_hh_{L-1}, b_{L-1},
            fc_w, fc_b, out_ref]
    x_ref:  (S*B_pad, input_size), time-major, batch padded to 8 (row = t*B_pad+b).
    Gate columns are pre-permuted to [f, i, o, g]; all recurrent / inter-layer /
    FC weights are row-zero-padded to 4H so full-width h vregs feed them directly.
    """
    L, S, Bp, H = num_layers, seq_len, batch_pad, hidden_size
    G = 4 * H
    f32 = jnp.float32

    w_refs = refs[:3 * L]
    fc_w_ref = refs[3 * L]
    fc_b_ref = refs[3 * L + 1]
    out_ref = refs[3 * L + 2]

    # Lane mask for the tanh (g) block of the permuted gate order [f, i, o, g].
    # Hoisted out of all loops (broadcast_in_dim is not CSE'd by JAX).
    lane = jax.lax.broadcasted_iota(jnp.int32, (Bp, G), 1)
    g_block = lane >= 3 * H

    # ---- Hoisted layer-0 input projection: one (S*Bp, D) x (D, 4H) MXU pass ----
    # (bias folded in).  Per-step reads below are sublane-tile-aligned (Bp = 8),
    # i.e. pure offsets — equivalent to xp[t] on an (S, Bp, 4H) layout.
    w_ih0 = w_refs[0][...].astype(f32)
    b0 = w_refs[2][...].astype(f32)
    xp0 = jnp.dot(x_ref[...].astype(f32), w_ih0,
                  preferred_element_type=f32) + b0          # (S*Bp, 4H)

    # Load weights once (single grid step => single-buffered, no re-fetch).
    w_ih = [None] + [w_refs[3 * l][...].astype(f32) for l in range(1, L)]
    w_hh = [w_refs[3 * l + 1][...].astype(f32) for l in range(L)]
    bias = [None] + [w_refs[3 * l + 2][...].astype(f32) for l in range(1, L)]

    h = [jnp.zeros((Bp, G), f32) for _ in range(L)]
    c = [jnp.zeros((Bp, G), f32) for _ in range(L)]

    def cell(pre, h_prev, c_prev, w_hh_l):
        # pre already contains x-projection + bias.  Full-vreg gate math:
        gates = pre + jnp.dot(h_prev, w_hh_l, preferred_element_type=f32)
        # act = [F | I | O | G] (sigmoid everywhere except the g block).
        act = jnp.where(g_block, jnp.tanh(gates), jax.nn.sigmoid(gates))
        # Half rotation (direction-agnostic): act2 = [O | G | F | I].
        act2 = pltpu.roll(act, 2 * H, 1)
        # act*act2 holds I*G in blocks 1 and 3; a roll by H lands I*G in block 0
        # regardless of roll direction.
        ig = pltpu.roll(act * act2, H, 1)
        # Block 0 (lanes [0:H)) carries the real state; other blocks are finite
        # garbage that the zero-padded weight rows annihilate downstream.
        c_new = act * c_prev + ig                    # block0: F*c + I*G
        h_new = act2 * jnp.tanh(c_new)               # block0: O*tanh(c_new)
        return h_new, c_new

    # ---- Wavefront over (layer, time): chain length S+L-1 diagonals ----
    # Within a diagonal, process layers in DECREASING order so each cell reads
    # the start-of-diagonal h of the layer below / its own previous step.
    # (S is small & static: Python unroll.  For large S use lax.fori_loop.)
    for d in range(S + L - 1):
        l_hi = min(L - 1, d)
        l_lo = max(0, d - S + 1)
        for l in range(l_hi, l_lo - 1, -1):
            t = d - l
            if l == 0:
                pre = xp0[t * Bp:(t + 1) * Bp, :]    # tile-aligned static slice
            else:
                # Tiny per-step input projection of the layer below (wavefront).
                pre = jnp.dot(h[l - 1], w_ih[l],
                              preferred_element_type=f32) + bias[l]
            h[l], c[l] = cell(pre, h[l], c[l], w_hh[l])

    # ---- Fused final Linear on each layer's final hidden state ----
    # fc_w rows >= H are zero, so the full-width h feeds the MXU directly;
    # output slab is lane-dense (C padded to 128) -> unmasked stores.
    fc_w = fc_w_ref[...].astype(f32)
    fc_b = fc_b_ref[...].astype(f32)
    for l in range(L):
        out = jnp.dot(h[l], fc_w, preferred_element_type=f32) + fc_b
        out_ref[l * Bp:(l + 1) * Bp, :] = out.astype(out_ref.dtype)


# ------------------------------- Wrapper ------------------------------------


def _permute_gate_cols(w):
    """Canonical PyTorch gate order [i, f, g, o] -> kernel order [f, i, o, g]."""
    H = w.shape[-1] // 4
    return jnp.concatenate(
        [w[..., H:2 * H], w[..., 0:H], w[..., 3 * H:4 * H], w[..., 2 * H:3 * H]],
        axis=-1)


def lstm_model_forward(x, params):
    """x: (B, S, input_size). Returns (num_layers * B, num_classes), like PyTorch."""
    B, S, D = x.shape
    L = len(params["lstm"])
    H = params["lstm"][0]["w_hh"].shape[0]
    C = params["fc_w"].shape[1]
    G = 4 * H
    B_pad = ((B + 7) // 8) * 8           # sublane multiple
    C_pad = ((C + 127) // 128) * 128     # lane-dense output slab

    # Time-major, batch padded with zero rows, flattened (row = t*B_pad + b).
    x_t = jnp.transpose(x, (1, 0, 2)).astype(jnp.float32)          # (S, B, D)
    x_t = jnp.pad(x_t, ((0, 0), (0, B_pad - B), (0, 0)))           # (S, Bp, D)
    x_flat = x_t.reshape(S * B_pad, D)

    args = [x_flat]
    for li, lp in enumerate(params["lstm"]):
        w_ih = _permute_gate_cols(lp["w_ih"])
        w_hh = _permute_gate_cols(lp["w_hh"])
        b = _permute_gate_cols(lp["b"])
        if li > 0:
            # Zero-pad rows [H:4H) so a full-width (Bp, 4H) h feeds it directly.
            w_ih = jnp.pad(w_ih, ((0, G - w_ih.shape[0]), (0, 0)))
        w_hh = jnp.pad(w_hh, ((0, G - H), (0, 0)))
        args += [w_ih, w_hh, b]
    fc_w = jnp.pad(params["fc_w"], ((0, G - H), (0, C_pad - C)))
    fc_b = jnp.pad(params["fc_b"], ((0, 0), (0, C_pad - C)))
    args += [fc_w, fc_b]

    kernel = functools.partial(_fused_lstm_fc_kernel, num_layers=L, seq_len=S,
                               batch_pad=B_pad, hidden_size=H)

    # No grid: single invocation, every operand resident in VMEM once.  When
    # scaling (large S*B): add a sequence-chunk grid axis ('arbitrary') with h/c
    # carried in VMEM scratch, a 'parallel' batch axis for the 2nd v7x core, and
    # set vmem_limit_bytes via pltpu.CompilerParams.
    out = pl.pallas_call(
        kernel,
        out_shape=jax.ShapeDtypeStruct((L * B_pad, C_pad), jnp.float32),
        in_specs=[pl.BlockSpec(memory_space=pltpu.MemorySpace.VMEM)
                  for _ in args],
        out_specs=pl.BlockSpec(memory_space=pltpu.MemorySpace.VMEM),
    )(*args)

    # Drop batch-pad rows / lane-pad cols; preserves layer-major, batch-minor
    # ordering of PyTorch's h_out.view(-1, hidden).
    out = out.reshape(L, B_pad, C_pad)[:, :B, :C].reshape(L * B, C)
    return out.astype(x.dtype)


# ------------------------------ Params & reference ---------------------------


def init_params(key, num_classes, input_size, hidden_size, num_layers):
    """Deterministic init matching PyTorch shapes (weights stored pre-transposed,
    canonical [i, f, g, o] gate order)."""
    params = {"lstm": []}
    bound = 1.0 / jnp.sqrt(hidden_size)
    in_dim = input_size
    for _ in range(num_layers):
        key, k1, k2, k3, k4 = jax.random.split(key, 5)
        w_ih = jax.random.uniform(k1, (in_dim, 4 * hidden_size),
                                  jnp.float32, -bound, bound)
        w_hh = jax.random.uniform(k2, (hidden_size, 4 * hidden_size),
                                  jnp.float32, -bound, bound)
        b_ih = jax.random.uniform(k3, (4 * hidden_size,), jnp.float32, -bound, bound)
        b_hh = jax.random.uniform(k4, (4 * hidden_size,), jnp.float32, -bound, bound)
        params["lstm"].append({"w_ih": w_ih, "w_hh": w_hh,
                               "b": (b_ih + b_hh).reshape(1, -1)})
        in_dim = hidden_size
    key, k5, k6 = jax.random.split(key, 3)
    fb = 1.0 / jnp.sqrt(hidden_size)
    params["fc_w"] = jax.random.uniform(k5, (hidden_size, num_classes),
                                        jnp.float32, -fb, fb)
    params["fc_b"] = jax.random.uniform(k6, (1, num_classes),
                                        jnp.float32, -fb, fb)
    return params


def lstm_model_reference(x, params):
    """Pure-JAX reference of the same forward pass (for validation)."""
    B = x.shape[0]
    h_finals = []
    inp = x
    for lp in params["lstm"]:
        H = lp["w_hh"].shape[0]
        h = jnp.zeros((B, H), jnp.float32)
        c = jnp.zeros((B, H), jnp.float32)
        ys = []
        for t in range(x.shape[1]):
            gates = inp[:, t, :] @ lp["w_ih"] + h @ lp["w_hh"] + lp["b"]
            i_g = jax.nn.sigmoid(gates[:, :H])
            f_g = jax.nn.sigmoid(gates[:, H:2 * H])
            g_g = jnp.tanh(gates[:, 2 * H:3 * H])
            o_g = jax.nn.sigmoid(gates[:, 3 * H:])
            c = f_g * c + i_g * g_g
            h = o_g * jnp.tanh(c)
            ys.append(h)
        inp = jnp.stack(ys, axis=1)
        h_finals.append(h)
    h_view = jnp.stack(h_finals, 0).reshape(-1, h_finals[0].shape[-1])
    return h_view @ params["fc_w"] + params["fc_b"]


# ----------------------------------- Main -----------------------------------


if __name__ == "__main__":
    num_classes, input_size, hidden_size, num_layers, seq_length = 4, 8, 32, 2, 8
    batch = 2

    key = jax.random.PRNGKey(0)
    key, kx = jax.random.split(key)
    x = jax.random.normal(kx, (batch, seq_length, input_size), jnp.float32)
    params = init_params(key, num_classes, input_size, hidden_size, num_layers)

    out = lstm_model_forward(x, params)
    out = jax.block_until_ready(out)

    ref = lstm_model_reference(x, params)
    assert out.shape == (num_layers * batch, num_classes), out.shape
    assert jnp.allclose(out, ref, atol=2e-3, rtol=2e-3), \
        f"max abs diff {jnp.max(jnp.abs(out - ref))}"

    print("KERNEL_OK")
</pallas_src>

<mosaic_0001>
module attributes {stable_mosaic.version = 11 : i64} {
  func.func @_fused_lstm_fc_kernel(%arg0: memref<64x8xf32, #tpu.memory_space<vmem>>, %arg1: memref<8x128xf32, #tpu.memory_space<vmem>>, %arg2: memref<128x128xf32, #tpu.memory_space<vmem>>, %arg3: memref<1x128xf32, #tpu.memory_space<vmem>>, %arg4: memref<128x128xf32, #tpu.memory_space<vmem>>, %arg5: memref<128x128xf32, #tpu.memory_space<vmem>>, %arg6: memref<1x128xf32, #tpu.memory_space<vmem>>, %arg7: memref<128x128xf32, #tpu.memory_space<vmem>>, %arg8: memref<1x128xf32, #tpu.memory_space<vmem>>, %arg9: memref<16x128xf32, #tpu.memory_space<vmem>>) attributes {dimension_semantics = [], scalar_prefetch = 0 : i64, scratch_operands = 0 : i64, tpu.core_type = #tpu.core_type<tc>} {
    %0 = tpu.iota {dimensions = array<i32: 1>} : vector<8x128xi32>
    %c96_i32 = arith.constant 96 : i32
    %1 = vector.broadcast %c96_i32 : i32 to vector<8x128xi32>
    %2 = arith.cmpi sge, %0, %1 : vector<8x128xi32>
    %c0 = arith.constant 0 : index
    %c0_0 = arith.constant 0 : index
    %3 = vector.load %arg1[%c0, %c0_0] : memref<8x128xf32, #tpu.memory_space<vmem>>, vector<8x128xf32>
    %c0_1 = arith.constant 0 : index
    %c0_2 = arith.constant 0 : index
    %4 = vector.load %arg3[%c0_1, %c0_2] : memref<1x128xf32, #tpu.memory_space<vmem>>, vector<1x128xf32>
    %c0_3 = arith.constant 0 : index
    %c0_4 = arith.constant 0 : index
    %5 = vector.load %arg0[%c0_3, %c0_4] : memref<64x8xf32, #tpu.memory_space<vmem>>, vector<64x8xf32>
    %cst = arith.constant dense<0.000000e+00> : vector<64x128xf32>
    %6 = tpu.matmul %5, %3, %cst {dimension_numbers = #tpu.dot_dimension_numbers<[1], [0], [0], [1], [0, 0, 1, 1], [], []>} : vector<64x8xf32>, vector<8x128xf32>, vector<64x128xf32> -> vector<64x128xf32>
    %7 = vector.broadcast %4 : vector<1x128xf32> to vector<64x128xf32>
    %8 = arith.addf %6, %7 : vector<64x128xf32>
    %c0_5 = arith.constant 0 : index
    %c0_6 = arith.constant 0 : index
    %9 = vector.load %arg4[%c0_5, %c0_6] : memref<128x128xf32, #tpu.memory_space<vmem>>, vector<128x128xf32>
    %c0_7 = arith.constant 0 : index
    %c0_8 = arith.constant 0 : index
    %10 = vector.load %arg2[%c0_7, %c0_8] : memref<128x128xf32, #tpu.memory_space<vmem>>, vector<128x128xf32>
    %c0_9 = arith.constant 0 : index
    %c0_10 = arith.constant 0 : index
    %11 = vector.load %arg5[%c0_9, %c0_10] : memref<128x128xf32, #tpu.memory_space<vmem>>, vector<128x128xf32>
    %c0_11 = arith.constant 0 : index
    %c0_12 = arith.constant 0 : index
    %12 = vector.load %arg6[%c0_11, %c0_12] : memref<1x128xf32, #tpu.memory_space<vmem>>, vector<1x128xf32>
    %cst_13 = arith.constant 0.000000e+00 : f32
    %13 = vector.broadcast %cst_13 : f32 to vector<8x128xf32>
    %cst_14 = arith.constant 0.000000e+00 : f32
    %14 = vector.broadcast %cst_14 : f32 to vector<8x128xf32>
    %cst_15 = arith.constant 0.000000e+00 : f32
    %15 = vector.broadcast %cst_15 : f32 to vector<8x128xf32>
    %cst_16 = arith.constant 0.000000e+00 : f32
    %16 = vector.broadcast %cst_16 : f32 to vector<8x128xf32>
    %17 = vector.extract_strided_slice %8 {offsets = [0, 0], sizes = [8, 128], strides = [1, 1]} : vector<64x128xf32> to vector<8x128xf32>
    %cst_17 = arith.constant dense<0.000000e+00> : vector<8x128xf32>
    %18 = tpu.matmul %13, %10, %cst_17 {dimension_numbers = #tpu.dot_dimension_numbers<[1], [0], [0], [1], [0, 0, 1, 1], [], []>} : vector<8x128xf32>, vector<128x128xf32>, vector<8x128xf32> -> vector<8x128xf32>
    %19 = arith.addf %17, %18 : vector<8x128xf32>
    %20 = math.tanh %19 : vector<8x128xf32>
    %21 = arith.negf %19 : vector<8x128xf32>
    %22 = math.exp %21 : vector<8x128xf32>
    %cst_18 = arith.constant 1.000000e+00 : f32
    %23 = vector.broadcast %cst_18 : f32 to vector<8x128xf32>
    %24 = arith.addf %23, %22 : vector<8x128xf32>
    %25 = arith.divf %23, %24 : vector<8x128xf32>
    %26 = arith.select %2, %20, %25 : vector<8x128xi1>, vector<8x128xf32>
    %c64_i32 = arith.constant 64 : i32
    %27 = tpu.dynamic_rotate %26 by %c64_i32 dim 1 : vector<8x128xf32>, i32 -> vector<8x128xf32>
    %28 = arith.mulf %26, %27 : vector<8x128xf32>
    %c32_i32 = arith.constant 32 : i32
    %29 = tpu.dynamic_rotate %28 by %c32_i32 dim 1 : vector<8x128xf32>, i32 -> vector<8x128xf32>
    %30 = arith.mulf %26, %15 : vector<8x128xf32>
    %31 = arith.addf %30, %29 : vector<8x128xf32>
    %32 = math.tanh %31 : vector<8x128xf32>
    %33 = arith.mulf %27, %32 : vector<8x128xf32>
    %cst_19 = arith.constant dense<0.000000e+00> : vector<8x128xf32>
    %34 = tpu.matmul %33, %9, %cst_19 {dimension_numbers = #tpu.dot_dimension_numbers<[1], [0], [0], [1], [0, 0, 1, 1], [], []>} : vector<8x128xf32>, vector<128x128xf32>, vector<8x128xf32> -> vector<8x128xf32>
    %35 = vector.broadcast %12 : vector<1x128xf32> to vector<8x128xf32>
    %36 = arith.addf %34, %35 : vector<8x128xf32>
    %cst_20 = arith.constant dense<0.000000e+00> : vector<8x128xf32>
    %37 = tpu.matmul %14, %11, %cst_20 {dimension_numbers = #tpu.dot_dimension_numbers<[1], [0], [0], [1], [0, 0, 1, 1], [], []>} : vector<8x128xf32>, vector<128x128xf32>, vector<8x128xf32> -> vector<8x128xf32>
    %38 = arith.addf %36, %37 : vector<8x128xf32>
    %39 = math.tanh %38 : vector<8x128xf32>
    %40 = arith.negf %38 : vector<8x128xf32>
    %41 = math.exp %40 : vector<8x128xf32>
    %cst_21 = arith.constant 1.000000e+00 : f32
    %42 = vector.broadcast %cst_21 : f32 to vector<8x128xf32>
    %43 = arith.addf %42, %41 : vector<8x128xf32>
    %44 = arith.divf %42, %43 : vector<8x128xf32>
    %45 = arith.select %2, %39, %44 : vector<8x128xi1>, vector<8x128xf32>
    %c64_i32_22 = arith.constant 64 : i32
    %46 = tpu.dynamic_rotate %45 by %c64_i32_22 dim 1 : vector<8x128xf32>, i32 -> vector<8x128xf32>
    %47 = arith.mulf %45, %46 : vector<8x128xf32>
    %c32_i32_23 = arith.constant 32 : i32
    %48 = tpu.dynamic_rotate %47 by %c32_i32_23 dim 1 : vector<8x128xf32>, i32 -> vector<8x128xf32>
    %49 = arith.mulf %45, %16 : vector<8x128xf32>
    %50 = arith.addf %49, %48 : vector<8x128xf32>
    %51 = math.tanh %50 : vector<8x128xf32>
    %52 = arith.mulf %46, %51 : vector<8x128xf32>
    %53 = vector.extract_strided_slice %8 {offsets = [8, 0], sizes = [8, 128], strides = [1, 1]} : vector<64x128xf32> to vector<8x128xf32>
    %cst_24 = arith.constant dense<0.000000e+00> : vector<8x128xf32>
    %54 = tpu.matmul %33, %10, %cst_24 {dimension_numbers = #tpu.dot_dimension_numbers<[1], [0], [0], [1], [0, 0, 1, 1], [], []>} : vector<8x128xf32>, vector<128x128xf32>, vector<8x128xf32> -> vector<8x128xf32>
    %55 = arith.addf %53, %54 : vector<8x128xf32>
    %56 = math.tanh %55 : vector<8x128xf32>
    %57 = arith.negf %55 : vector<8x128xf32>
    %58 = math.exp %57 : vector<8x128xf32>
    %cst_25 = arith.constant 1.000000e+00 : f32
    %59 = vector.broadcast %cst_25 : f32 to vector<8x128xf32>
    %60 = arith.addf %59, %58 : vector<8x128xf32>
    %61 = arith.divf %59, %60 : vector<8x128xf32>
    %62 = arith.select %2, %56, %61 : vector<8x128xi1>, vector<8x128xf32>
    %c64_i32_26 = arith.constant 64 : i32
    %63 = tpu.dynamic_rotate %62 by %c64_i32_26 dim 1 : vector<8x128xf32>, i32 -> vector<8x128xf32>
    %64 = arith.mulf %62, %63 : vector<8x128xf32>
    %c32_i32_27 = arith.constant 32 : i32
    %65 = tpu.dynamic_rotate %64 by %c32_i32_27 dim 1 : vector<8x128xf32>, i32 -> vector<8x128xf32>
    %66 = arith.mulf %62, %31 : vector<8x128xf32>
    %67 = arith.addf %66, %65 : vector<8x128xf32>
    %68 = math.tanh %67 : vector<8x128xf32>
    %69 = arith.mulf %63, %68 : vector<8x128xf32>
    %cst_28 = arith.constant dense<0.000000e+00> : vector<8x128xf32>
    %70 = tpu.matmul %69, %9, %cst_28 {dimension_numbers = #tpu.dot_dimension_numbers<[1], [0], [0], [1], [0, 0, 1, 1], [], []>} : vector<8x128xf32>, vector<128x128xf32>, vector<8x128xf32> -> vector<8x128xf32>
    %71 = vector.broadcast %12 : vector<1x128xf32> to vector<8x128xf32>
    %72 = arith.addf %70, %71 : vector<8x128xf32>
    %cst_29 = arith.constant dense<0.000000e+00> : vector<8x128xf32>
    %73 = tpu.matmul %52, %11, %cst_29 {dimension_numbers = #tpu.dot_dimension_numbers<[1], [0], [0], [1], [0, 0, 1, 1], [], []>} : vector<8x128xf32>, vector<128x128xf32>, vector<8x128xf32> -> vector<8x128xf32>
    %74 = arith.addf %72, %73 : vector<8x128xf32>
    %75 = math.tanh %74 : vector<8x128xf32>
    %76 = arith.negf %74 : vector<8x128xf32>
    %77 = math.exp %76 : vector<8x128xf32>
    %cst_30 = arith.constant 1.000000e+00 : f32
    %78 = vector.broadcast %cst_30 : f32 to vector<8x128xf32>
    %79 = arith.addf %78, %77 : vector<8x128xf32>
    %80 = arith.divf %78, %79 : vector<8x128xf32>
    %81 = arith.select %2, %75, %80 : vector<8x128xi1>, vector<8x128xf32>
    %c64_i32_31 = arith.constant 64 : i32
    %82 = tpu.dynamic_rotate %81 by %c64_i32_31 dim 1 : vector<8x128xf32>, i32 -> vector<8x128xf32>
    %83 = arith.mulf %81, %82 : vector<8x128xf32>
    %c32_i32_32 = arith.constant 32 : i32
    %84 = tpu.dynamic_rotate %83 by %c32_i32_32 dim 1 : vector<8x128xf32>, i32 -> vector<8x128xf32>
    %85 = arith.mulf %81, %50 : vector<8x128xf32>
    %86 = arith.addf %85, %84 : vector<8x128xf32>
    %87 = math.tanh %86 : vector<8x128xf32>
    %88 = arith.mulf %82, %87 : vector<8x128xf32>
    %89 = vector.extract_strided_slice %8 {offsets = [16, 0], sizes = [8, 128], strides = [1, 1]} : vector<64x128xf32> to vector<8x128xf32>
    %cst_33 = arith.constant dense<0.000000e+00> : vector<8x128xf32>
    %90 = tpu.matmul %69, %10, %cst_33 {dimension_numbers = #tpu.dot_dimension_numbers<[1], [0], [0], [1], [0, 0, 1, 1], [], []>} : vector<8x128xf32>, vector<128x128xf32>, vector<8x128xf32> -> vector<8x128xf32>
    %91 = arith.addf %89, %90 : vector<8x128xf32>
    %92 = math.tanh %91 : vector<8x128xf32>
    %93 = arith.negf %91 : vector<8x128xf32>
    %94 = math.exp %93 : vector<8x128xf32>
    %cst_34 = arith.constant 1.000000e+00 : f32
    %95 = vector.broadcast %cst_34 : f32 to vector<8x128xf32>
    %96 = arith.addf %95, %94 : vector<8x128xf32>
    %97 = arith.divf %95, %96 : vector<8x128xf32>
    %98 = arith.select %2, %92, %97 : vector<8x128xi1>, vector<8x128xf32>
    %c64_i32_35 = arith.constant 64 : i32
    %99 = tpu.dynamic_rotate %98 by %c64_i32_35 dim 1 : vector<8x128xf32>, i32 -> vector<8x128xf32>
    %100 = arith.mulf %98, %99 : vector<8x128xf32>
    %c32_i32_36 = arith.constant 32 : i32
    %101 = tpu.dynamic_rotate %100 by %c32_i32_36 dim 1 : vector<8x128xf32>, i32 -> vector<8x128xf32>
    %102 = arith.mulf %98, %67 : vector<8x128xf32>
    %103 = arith.addf %102, %101 : vector<8x128xf32>
    %104 = math.tanh %103 : vector<8x128xf32>
    %105 = arith.mulf %99, %104 : vector<8x128xf32>
    %cst_37 = arith.constant dense<0.000000e+00> : vector<8x128xf32>
    %106 = tpu.matmul %105, %9, %cst_37 {dimension_numbers = #tpu.dot_dimension_numbers<[1], [0], [0], [1], [0, 0, 1, 1], [], []>} : vector<8x128xf32>, vector<128x128xf32>, vector<8x128xf32> -> vector<8x128xf32>
    %107 = vector.broadcast %12 : vector<1x128xf32> to vector<8x128xf32>
    %108 = arith.addf %106, %107 : vector<8x128xf32>
    %cst_38 = arith.constant dense<0.000000e+00> : vector<8x128xf32>
    %109 = tpu.matmul %88, %11, %cst_38 {dimension_numbers = #tpu.dot_dimension_numbers<[1], [0], [0], [1], [0, 0, 1, 1], [], []>} : vector<8x128xf32>, vector<128x128xf32>, vector<8x128xf32> -> vector<8x128xf32>
    %110 = arith.addf %108, %109 : vector<8x128xf32>
    %111 = math.tanh %110 : vector<8x128xf32>
    %112 = arith.negf %110 : vector<8x128xf32>
    %113 = math.exp %112 : vector<8x128xf32>
    %cst_39 = arith.constant 1.000000e+00 : f32
    %114 = vector.broadcast %cst_39 : f32 to vector<8x128xf32>
    %115 = arith.addf %114, %113 : vector<8x128xf32>
    %116 = arith.divf %114, %115 : vector<8x128xf32>
    %117 = arith.select %2, %111, %116 : vector<8x128xi1>, vector<8x128xf32>
    %c64_i32_40 = arith.constant 64 : i32
    %118 = tpu.dynamic_rotate %117 by %c64_i32_40 dim 1 : vector<8x128xf32>, i32 -> vector<8x128xf32>
    %119 = arith.mulf %117, %118 : vector<8x128xf32>
    %c32_i32_41 = arith.constant 32 : i32
    %120 = tpu.dynamic_rotate %119 by %c32_i32_41 dim 1 : vector<8x128xf32>, i32 -> vector<8x128xf32>
    %121 = arith.mulf %117, %86 : vector<8x128xf32>
    %122 = arith.addf %121, %120 : vector<8x128xf32>
    %123 = math.tanh %122 : vector<8x128xf32>
    %124 = arith.mulf %118, %123 : vector<8x128xf32>
    %125 = vector.extract_strided_slice %8 {offsets = [24, 0], sizes = [8, 128], strides = [1, 1]} : vector<64x128xf32> to vector<8x128xf32>
    %cst_42 = arith.constant dense<0.000000e+00> : vector<8x128xf32>
    %126 = tpu.matmul %105, %10, %cst_42 {dimension_numbers = #tpu.dot_dimension_numbers<[1], [0], [0], [1], [0, 0, 1, 1], [], []>} : vector<8x128xf32>, vector<128x128xf32>, vector<8x128xf32> -> vector<8x128xf32>
    %127 = arith.addf %125, %126 : vector<8x128xf32>
    %128 = math.tanh %127 : vector<8x128xf32>
    %129 = arith.negf %127 : vector<8x128xf32>
    %130 = math.exp %129 : vector<8x128xf32>
    %cst_43 = arith.constant 1.000000e+00 : f32
    %131 = vector.broadcast %cst_43 : f32 to vector<8x128xf32>
    %132 = arith.addf %131, %130 : vector<8x128xf32>
    %133 = arith.divf %131, %132 : vector<8x128xf32>
    %134 = arith.select %2, %128, %133 : vector<8x128xi1>, vector<8x128xf32>
    %c64_i32_44 = arith.constant 64 : i32
    %135 = tpu.dynamic_rotate %134 by %c64_i32_44 dim 1 : vector<8x128xf32>, i32 -> vector<8x128xf32>
    %136 = arith.mulf %134, %135 : vector<8x128xf32>
    %c32_i32_45 = arith.constant 32 : i32
    %137 = tpu.dynamic_rotate %136 by %c32_i32_45 dim 1 : vector<8x128xf32>, i32 -> vector<8x128xf32>
    %138 = arith.mulf %134, %103 : vector<8x128xf32>
    %139 = arith.addf %138, %137 : vector<8x128xf32>
    %140 = math.tanh %139 : vector<8x128xf32>
    %141 = arith.mulf %135, %140 : vector<8x128xf32>
    %cst_46 = arith.constant dense<0.000000e+00> : vector<8x128xf32>
    %142 = tpu.matmul %141, %9, %cst_46 {dimension_numbers = #tpu.dot_dimension_numbers<[1], [0], [0], [1], [0, 0, 1, 1], [], []>} : vector<8x128xf32>, vector<128x128xf32>, vector<8x128xf32> -> vector<8x128xf32>
    %143 = vector.broadcast %12 : vector<1x128xf32> to vector<8x128xf32>
    %144 = arith.addf %142, %143 : vector<8x128xf32>
    %cst_47 = arith.constant dense<0.000000e+00> : vector<8x128xf32>
    %145 = tpu.matmul %124, %11, %cst_47 {dimension_numbers = #tpu.dot_dimension_numbers<[1], [0], [0], [1], [0, 0, 1, 1], [], []>} : vector<8x128xf32>, vector<128x128xf32>, vector<8x128xf32> -> vector<8x128xf32>
    %146 = arith.addf %144, %145 : vector<8x128xf32>
    %147 = math.tanh %146 : vector<8x128xf32>
    %148 = arith.negf %146 : vector<8x128xf32>
    %149 = math.exp %148 : vector<8x128xf32>
    %cst_48 = arith.constant 1.000000e+00 : f32
    %150 = vector.broadcast %cst_48 : f32 to vector<8x128xf32>
    %151 = arith.addf %150, %149 : vector<8x128xf32>
    %152 = arith.divf %150, %151 : vector<8x128xf32>
    %153 = arith.select %2, %147, %152 : vector<8x128xi1>, vector<8x128xf32>
    %c64_i32_49 = arith.constant 64 : i32
    %154 = tpu.dynamic_rotate %153 by %c64_i32_49 dim 1 : vector<8x128xf32>, i32 -> vector<8x128xf32>
    %155 = arith.mulf %153, %154 : vector<8x128xf32>
    %c32_i32_50 = arith.constant 32 : i32
    %156 = tpu.dynamic_rotate %155 by %c32_i32_50 dim 1 : vector<8x128xf32>, i32 -> vector<8x128xf32>
    %157 = arith.mulf %153, %122 : vector<8x128xf32>
    %158 = arith.addf %157, %156 : vector<8x128xf32>
    %159 = math.tanh %158 : vector<8x128xf32>
    %160 = arith.mulf %154, %159 : vector<8x128xf32>
    %161 = vector.extract_strided_slice %8 {offsets = [32, 0], sizes = [8, 128], strides = [1, 1]} : vector<64x128xf32> to vector<8x128xf32>
    %cst_51 = arith.constant dense<0.000000e+00> : vector<8x128xf32>
    %162 = tpu.matmul %141, %10, %cst_51 {dimension_numbers = #tpu.dot_dimension_numbers<[1], [0], [0], [1], [0, 0, 1, 1], [], []>} : vector<8x128xf32>, vector<128x128xf32>, vector<8x128xf32> -> vector<8x128xf32>
    %163 = arith.addf %161, %162 : vector<8x128xf32>
    %164 = math.tanh %163 : vector<8x128xf32>
    %165 = arith.negf %163 : vector<8x128xf32>
    %166 = math.exp %165 : vector<8x128xf32>
    %cst_52 = arith.constant 1.000000e+00 : f32
    %167 = vector.broadcast %cst_52 : f32 to vector<8x128xf32>
    %168 = arith.addf %167, %166 : vector<8x128xf32>
    %169 = arith.divf %167, %168 : vector<8x128xf32>
    %170 = arith.select %2, %164, %169 : vector<8x128xi1>, vector<8x128xf32>
    %c64_i32_53 = arith.constant 64 : i32
    %171 = tpu.dynamic_rotate %170 by %c64_i32_53 dim 1 : vector<8x128xf32>, i32 -> vector<8x128xf32>
    %172 = arith.mulf %170, %171 : vector<8x128xf32>
    %c32_i32_54 = arith.constant 32 : i32
    %173 = tpu.dynamic_rotate %172 by %c32_i32_54 dim 1 : vector<8x128xf32>, i32 -> vector<8x128xf32>
    %174 = arith.mulf %170, %139 : vector<8x128xf32>
    %175 = arith.addf %174, %173 : vector<8x128xf32>
    %176 = math.tanh %175 : vector<8x128xf32>
    %177 = arith.mulf %171, %176 : vector<8x128xf32>
    %cst_55 = arith.constant dense<0.000000e+00> : vector<8x128xf32>
    %178 = tpu.matmul %177, %9, %cst_55 {dimension_numbers = #tpu.dot_dimension_numbers<[1], [0], [0], [1], [0, 0, 1, 1], [], []>} : vector<8x128xf32>, vector<128x128xf32>, vector<8x128xf32> -> vector<8x128xf32>
    %179 = vector.broadcast %12 : vector<1x128xf32> to vector<8x128xf32>
    %180 = arith.addf %178, %179 : vector<8x128xf32>
    %cst_56 = arith.constant dense<0.000000e+00> : vector<8x128xf32>
    %181 = tpu.matmul %160, %11, %cst_56 {dimension_numbers = #tpu.dot_dimension_numbers<[1], [0], [0], [1], [0, 0, 1, 1], [], []>} : vector<8x128xf32>, vector<128x128xf32>, vector<8x128xf32> -> vector<8x128xf32>
    %182 = arith.addf %180, %181 : vector<8x128xf32>
    %183 = math.tanh %182 : vector<8x128xf32>
    %184 = arith.negf %182 : vector<8x128xf32>
    %185 = math.exp %184 : vector<8x128xf32>
    %cst_57 = arith.constant 1.000000e+00 : f32
    %186 = vector.broadcast %cst_57 : f32 to vector<8x128xf32>
    %187 = arith.addf %186, %185 : vector<8x128xf32>
    %188 = arith.divf %186, %187 : vector<8x128xf32>
    %189 = arith.select %2, %183, %188 : vector<8x128xi1>, vector<8x128xf32>
    %c64_i32_58 = arith.constant 64 : i32
    %190 = tpu.dynamic_rotate %189 by %c64_i32_58 dim 1 : vector<8x128xf32>, i32 -> vector<8x128xf32>
    %191 = arith.mulf %189, %190 : vector<8x128xf32>
    %c32_i32_59 = arith.constant 32 : i32
    %192 = tpu.dynamic_rotate %191 by %c32_i32_59 dim 1 : vector<8x128xf32>, i32 -> vector<8x128xf32>
    %193 = arith.mulf %189, %158 : vector<8x128xf32>
    %194 = arith.addf %193, %192 : vector<8x128xf32>
    %195 = math.tanh %194 : vector<8x128xf32>
    %196 = arith.mulf %190, %195 : vector<8x128xf32>
    %197 = vector.extract_strided_slice %8 {offsets = [40, 0], sizes = [8, 128], strides = [1, 1]} : vector<64x128xf32> to vector<8x128xf32>
    %cst_60 = arith.constant dense<0.000000e+00> : vector<8x128xf32>
    %198 = tpu.matmul %177, %10, %cst_60 {dimension_numbers = #tpu.dot_dimension_numbers<[1], [0], [0], [1], [0, 0, 1, 1], [], []>} : vector<8x128xf32>, vector<128x128xf32>, vector<8x128xf32> -> vector<8x128xf32>
    %199 = arith.addf %197, %198 : vector<8x128xf32>
    %200 = math.tanh %199 : vector<8x128xf32>
    %201 = arith.negf %199 : vector<8x128xf32>
    %202 = math.exp %201 : vector<8x128xf32>
    %cst_61 = arith.constant 1.000000e+00 : f32
    %203 = vector.broadcast %cst_61 : f32 to vector<8x128xf32>
    %204 = arith.addf %203, %202 : vector<8x128xf32>
    %205 = arith.divf %203, %204 : vector<8x128xf32>
    %206 = arith.select %2, %200, %205 : vector<8x128xi1>, vector<8x128xf32>
    %c64_i32_62 = arith.constant 64 : i32
    %207 = tpu.dynamic_rotate %206 by %c64_i32_62 dim 1 : vector<8x128xf32>, i32 -> vector<8x128xf32>
    %208 = arith.mulf %206, %207 : vector<8x128xf32>
    %c32_i32_63 = arith.constant 32 : i32
    %209 = tpu.dynamic_rotate %208 by %c32_i32_63 dim 1 : vector<8x128xf32>, i32 -> vector<8x128xf32>
    %210 = arith.mulf %206, %175 : vector<8x128xf32>
    %211 = arith.addf %210, %209 : vector<8x128xf32>
    %212 = math.tanh %211 : vector<8x128xf32>
    %213 = arith.mulf %207, %212 : vector<8x128xf32>
    %cst_64 = arith.constant dense<0.000000e+00> : vector<8x128xf32>
    %214 = tpu.matmul %213, %9, %cst_64 {dimension_numbers = #tpu.dot_dimension_numbers<[1], [0], [0], [1], [0, 0, 1, 1], [], []>} : vector<8x128xf32>, vector<128x128xf32>, vector<8x128xf32> -> vector<8x128xf32>
    %215 = vector.broadcast %12 : vector<1x128xf32> to vector<8x128xf32>
    %216 = arith.addf %214, %215 : vector<8x128xf32>
    %cst_65 = arith.constant dense<0.000000e+00> : vector<8x128xf32>
    %217 = tpu.matmul %196, %11, %cst_65 {dimension_numbers = #tpu.dot_dimension_numbers<[1], [0], [0], [1], [0, 0, 1, 1], [], []>} : vector<8x128xf32>, vector<128x128xf32>, vector<8x128xf32> -> vector<8x128xf32>
    %218 = arith.addf %216, %217 : vector<8x128xf32>
    %219 = math.tanh %218 : vector<8x128xf32>
    %220 = arith.negf %218 : vector<8x128xf32>
    %221 = math.exp %220 : vector<8x128xf32>
    %cst_66 = arith.constant 1.000000e+00 : f32
    %222 = vector.broadcast %cst_66 : f32 to vector<8x128xf32>
    %223 = arith.addf %222, %221 : vector<8x128xf32>
    %224 = arith.divf %222, %223 : vector<8x128xf32>
    %225 = arith.select %2, %219, %224 : vector<8x128xi1>, vector<8x128xf32>
    %c64_i32_67 = arith.constant 64 : i32
    %226 = tpu.dynamic_rotate %225 by %c64_i32_67 dim 1 : vector<8x128xf32>, i32 -> vector<8x128xf32>
    %227 = arith.mulf %225, %226 : vector<8x128xf32>
    %c32_i32_68 = arith.constant 32 : i32
    %228 = tpu.dynamic_rotate %227 by %c32_i32_68 dim 1 : vector<8x128xf32>, i32 -> vector<8x128xf32>
    %229 = arith.mulf %225, %194 : vector<8x128xf32>
    %230 = arith.addf %229, %228 : vector<8x128xf32>
    %231 = math.tanh %230 : vector<8x128xf32>
    %232 = arith.mulf %226, %231 : vector<8x128xf32>
    %233 = vector.extract_strided_slice %8 {offsets = [48, 0], sizes = [8, 128], strides = [1, 1]} : vector<64x128xf32> to vector<8x128xf32>
    %cst_69 = arith.constant dense<0.000000e+00> : vector<8x128xf32>
    %234 = tpu.matmul %213, %10, %cst_69 {dimension_numbers = #tpu.dot_dimension_numbers<[1], [0], [0], [1], [0, 0, 1, 1], [], []>} : vector<8x128xf32>, vector<128x128xf32>, vector<8x128xf32> -> vector<8x128xf32>
    %235 = arith.addf %233, %234 : vector<8x128xf32>
    %236 = math.tanh %235 : vector<8x128xf32>
    %237 = arith.negf %235 : vector<8x128xf32>
    %238 = math.exp %237 : vector<8x128xf32>
    %cst_70 = arith.constant 1.000000e+00 : f32
    %239 = vector.broadcast %cst_70 : f32 to vector<8x128xf32>
    %240 = arith.addf %239, %238 : vector<8x128xf32>
    %241 = arith.divf %239, %240 : vector<8x128xf32>
    %242 = arith.select %2, %236, %241 : vector<8x128xi1>, vector<8x128xf32>
    %c64_i32_71 = arith.constant 64 : i32
    %243 = tpu.dynamic_rotate %242 by %c64_i32_71 dim 1 : vector<8x128xf32>, i32 -> vector<8x128xf32>
    %244 = arith.mulf %242, %243 : vector<8x128xf32>
    %c32_i32_72 = arith.constant 32 : i32
    %245 = tpu.dynamic_rotate %244 by %c32_i32_72 dim 1 : vector<8x128xf32>, i32 -> vector<8x128xf32>
    %246 = arith.mulf %242, %211 : vector<8x128xf32>
    %247 = arith.addf %246, %245 : vector<8x128xf32>
    %248 = math.tanh %247 : vector<8x128xf32>
    %249 = arith.mulf %243, %248 : vector<8x128xf32>
    %cst_73 = arith.constant dense<0.000000e+00> : vector<8x128xf32>
    %250 = tpu.matmul %249, %9, %cst_73 {dimension_numbers = #tpu.dot_dimension_numbers<[1], [0], [0], [1], [0, 0, 1, 1], [], []>} : vector<8x128xf32>, vector<128x128xf32>, vector<8x128xf32> -> vector<8x128xf32>
    %251 = vector.broadcast %12 : vector<1x128xf32> to vector<8x128xf32>
    %252 = arith.addf %250, %251 : vector<8x128xf32>
    %cst_74 = arith.constant dense<0.000000e+00> : vector<8x128xf32>
    %253 = tpu.matmul %232, %11, %cst_74 {dimension_numbers = #tpu.dot_dimension_numbers<[1], [0], [0], [1], [0, 0, 1, 1], [], []>} : vector<8x128xf32>, vector<128x128xf32>, vector<8x128xf32> -> vector<8x128xf32>
    %254 = arith.addf %252, %253 : vector<8x128xf32>
    %255 = math.tanh %254 : vector<8x128xf32>
    %256 = arith.negf %254 : vector<8x128xf32>
    %257 = math.exp %256 : vector<8x128xf32>
    %cst_75 = arith.constant 1.000000e+00 : f32
    %258 = vector.broadcast %cst_75 : f32 to vector<8x128xf32>
    %259 = arith.addf %258, %257 : vector<8x128xf32>
    %260 = arith.divf %258, %259 : vector<8x128xf32>
    %261 = arith.select %2, %255, %260 : vector<8x128xi1>, vector<8x128xf32>
    %c64_i32_76 = arith.constant 64 : i32
    %262 = tpu.dynamic_rotate %261 by %c64_i32_76 dim 1 : vector<8x128xf32>, i32 -> vector<8x128xf32>
    %263 = arith.mulf %261, %262 : vector<8x128xf32>
    %c32_i32_77 = arith.constant 32 : i32
    %264 = tpu.dynamic_rotate %263 by %c32_i32_77 dim 1 : vector<8x128xf32>, i32 -> vector<8x128xf32>
    %265 = arith.mulf %261, %230 : vector<8x128xf32>
    %266 = arith.addf %265, %264 : vector<8x128xf32>
    %267 = math.tanh %266 : vector<8x128xf32>
    %268 = arith.mulf %262, %267 : vector<8x128xf32>
    %269 = vector.extract_strided_slice %8 {offsets = [56, 0], sizes = [8, 128], strides = [1, 1]} : vector<64x128xf32> to vector<8x128xf32>
    %cst_78 = arith.constant dense<0.000000e+00> : vector<8x128xf32>
    %270 = tpu.matmul %249, %10, %cst_78 {dimension_numbers = #tpu.dot_dimension_numbers<[1], [0], [0], [1], [0, 0, 1, 1], [], []>} : vector<8x128xf32>, vector<128x128xf32>, vector<8x128xf32> -> vector<8x128xf32>
    %271 = arith.addf %269, %270 : vector<8x128xf32>
    %272 = math.tanh %271 : vector<8x128xf32>
    %273 = arith.negf %271 : vector<8x128xf32>
    %274 = math.exp %273 : vector<8x128xf32>
    %cst_79 = arith.constant 1.000000e+00 : f32
    %275 = vector.broadcast %cst_79 : f32 to vector<8x128xf32>
    %276 = arith.addf %275, %274 : vector<8x128xf32>
    %277 = arith.divf %275, %276 : vector<8x128xf32>
    %278 = arith.select %2, %272, %277 : vector<8x128xi1>, vector<8x128xf32>
    %c64_i32_80 = arith.constant 64 : i32
    %279 = tpu.dynamic_rotate %278 by %c64_i32_80 dim 1 : vector<8x128xf32>, i32 -> vector<8x128xf32>
    %280 = arith.mulf %278, %279 : vector<8x128xf32>
    %c32_i32_81 = arith.constant 32 : i32
    %281 = tpu.dynamic_rotate %280 by %c32_i32_81 dim 1 : vector<8x128xf32>, i32 -> vector<8x128xf32>
    %282 = arith.mulf %278, %247 : vector<8x128xf32>
    %283 = arith.addf %282, %281 : vector<8x128xf32>
    %284 = math.tanh %283 : vector<8x128xf32>
    %285 = arith.mulf %279, %284 : vector<8x128xf32>
    %cst_82 = arith.constant dense<0.000000e+00> : vector<8x128xf32>
    %286 = tpu.matmul %285, %9, %cst_82 {dimension_numbers = #tpu.dot_dimension_numbers<[1], [0], [0], [1], [0, 0, 1, 1], [], []>} : vector<8x128xf32>, vector<128x128xf32>, vector<8x128xf32> -> vector<8x128xf32>
    %287 = vector.broadcast %12 : vector<1x128xf32> to vector<8x128xf32>
    %288 = arith.addf %286, %287 : vector<8x128xf32>
    %cst_83 = arith.constant dense<0.000000e+00> : vector<8x128xf32>
    %289 = tpu.matmul %268, %11, %cst_83 {dimension_numbers = #tpu.dot_dimension_numbers<[1], [0], [0], [1], [0, 0, 1, 1], [], []>} : vector<8x128xf32>, vector<128x128xf32>, vector<8x128xf32> -> vector<8x128xf32>
    %290 = arith.addf %288, %289 : vector<8x128xf32>
    %291 = math.tanh %290 : vector<8x128xf32>
    %292 = arith.negf %290 : vector<8x128xf32>
    %293 = math.exp %292 : vector<8x128xf32>
    %cst_84 = arith.constant 1.000000e+00 : f32
    %294 = vector.broadcast %cst_84 : f32 to vector<8x128xf32>
    %295 = arith.addf %294, %293 : vector<8x128xf32>
    %296 = arith.divf %294, %295 : vector<8x128xf32>
    %297 = arith.select %2, %291, %296 : vector<8x128xi1>, vector<8x128xf32>
    %c64_i32_85 = arith.constant 64 : i32
    %298 = tpu.dynamic_rotate %297 by %c64_i32_85 dim 1 : vector<8x128xf32>, i32 -> vector<8x128xf32>
    %299 = arith.mulf %297, %298 : vector<8x128xf32>
    %c32_i32_86 = arith.constant 32 : i32
    %300 = tpu.dynamic_rotate %299 by %c32_i32_86 dim 1 : vector<8x128xf32>, i32 -> vector<8x128xf32>
    %301 = arith.mulf %297, %266 : vector<8x128xf32>
    %302 = arith.addf %301, %300 : vector<8x128xf32>
    %303 = math.tanh %302 : vector<8x128xf32>
    %304 = arith.mulf %298, %303 : vector<8x128xf32>
    %c0_87 = arith.constant 0 : index
    %c0_88 = arith.constant 0 : index
    %305 = vector.load %arg7[%c0_87, %c0_88] : memref<128x128xf32, #tpu.memory_space<vmem>>, vector<128x128xf32>
    %c0_89 = arith.constant 0 : index
    %c0_90 = arith.constant 0 : index
    %306 = vector.load %arg8[%c0_89, %c0_90] : memref<1x128xf32, #tpu.memory_space<vmem>>, vector<1x128xf32>
    %cst_91 = arith.constant dense<0.000000e+00> : vector<8x128xf32>
    %307 = tpu.matmul %285, %305, %cst_91 {dimension_numbers = #tpu.dot_dimension_numbers<[1], [0], [0], [1], [0, 0, 1, 1], [], []>} : vector<8x128xf32>, vector<128x128xf32>, vector<8x128xf32> -> vector<8x128xf32>
    %308 = vector.broadcast %306 : vector<1x128xf32> to vector<8x128xf32>
    %309 = arith.addf %307, %308 : vector<8x128xf32>
    %c0_92 = arith.constant 0 : index
    %c0_93 = arith.constant 0 : index
    %310 = vector.load %arg9[%c0_92, %c0_93] : memref<16x128xf32, #tpu.memory_space<vmem>>, vector<8x128xf32>
    tpu.vector_store %arg9[%c0_92, %c0_93], %309 {strides = array<i32>} : memref<16x128xf32, #tpu.memory_space<vmem>>, vector<8x128xf32>,
    %cst_94 = arith.constant dense<0.000000e+00> : vector<8x128xf32>
    %311 = tpu.matmul %304, %305, %cst_94 {dimension_numbers = #tpu.dot_dimension_numbers<[1], [0], [0], [1], [0, 0, 1, 1], [], []>} : vector<8x128xf32>, vector<128x128xf32>, vector<8x128xf32> -> vector<8x128xf32>
    %312 = vector.broadcast %306 : vector<1x128xf32> to vector<8x128xf32>
    %313 = arith.addf %311, %312 : vector<8x128xf32>
    %c8 = arith.constant 8 : index
    %c0_95 = arith.constant 0 : index
    %314 = vector.load %arg9[%c8, %c0_95] : memref<16x128xf32, #tpu.memory_space<vmem>>, vector<8x128xf32>
    tpu.vector_store %arg9[%c8, %c0_95], %313 {strides = array<i32>} : memref<16x128xf32, #tpu.memory_space<vmem>>, vector<8x128xf32>,
    return
  }
}

</mosaic_0001>

<llo_original>
// kernel: tpu_custom_call.1
$region0: #{tpu_custom_call.1}
  #allocation0 [shape = 'u32[]', space=smem, size = 0x4, offset = 0x4, fixed_abs, tag = 'smem constant byte address 0x4 - core index']
  #allocation1 [shape = 'u32[144,128]{1,0:T(1,128)}', space=vmem, size = 0x12000, scoped, tag = 'internal scratch']
  %s0 = inlined_call_operand.vmem [shape: f32[64,8], index: 0, kind: input, shape index: {}]
  %s1 = inlined_call_operand.vmem [shape: f32[8,128], index: 1, kind: input, shape index: {}]
  %s2 = inlined_call_operand.hbm [shape: f32[128,128], index: 2, kind: input, shape index: {}]
  %s3 = inlined_call_operand.vmem [shape: f32[1,128], index: 3, kind: input, shape index: {}]
  %s4 = inlined_call_operand.hbm [shape: f32[128,128], index: 4, kind: input, shape index: {}]
  %s5 = inlined_call_operand.hbm [shape: f32[128,128], index: 5, kind: input, shape index: {}]
  %s6 = inlined_call_operand.vmem [shape: f32[1,128], index: 6, kind: input, shape index: {}]
  %s7 = inlined_call_operand.hbm [shape: f32[128,128], index: 7, kind: input, shape index: {}]
  %s8 = inlined_call_operand.vmem [shape: f32[1,128], index: 8, kind: input, shape index: {}]
  %s9 = inlined_call_operand.hbm [shape: f32[16,128], index: 9, kind: output, shape index: {}]
  %s10 = sld [smem:[#allocation0]]
  $region62: #{tpu_custom_call.1} parent=0
    _
  %s12 = ssub.s32 1, %s10
  %s13 = scalar_select 0, %s12, %s10
  $region1: #{tpu_custom_call.1} parent=0
    #allocation2 [shape = 'u8[65536]{0}', space=vmem, size = 0x10000, scoped, tag = 'input window, operand 2, single buffered']
    #allocation3 [shape = 's32[1]{0}', space=sflag, size = 0x4, scoped, tag = 'scoped memory for tpu_custom_call.1']
    #allocation4 [shape = 's32[1]{0}', space=sflag, size = 0x4, scoped, tag = 'scoped memory for tpu_custom_call.1']
    #allocation5 [shape = 'u8[65536]{0}', space=vmem, size = 0x10000, scoped, tag = 'input window, operand 4, single buffered']
    #allocation6 [shape = 's32[1]{0}', space=sflag, size = 0x4, scoped, tag = 'scoped memory for tpu_custom_call.1']
    #allocation7 [shape = 'u8[65536]{0}', space=vmem, size = 0x10000, scoped, tag = 'input window, operand 5, single buffered']
    #allocation8 [shape = 'u8[65536]{0}', space=vmem, size = 0x10000, scoped, tag = 'input window, operand 7, single buffered']
    #allocation9 [shape = 's32[1]{0}', space=sflag, size = 0x4, scoped, tag = 'scoped memory for tpu_custom_call.1']
    #allocation10 [shape = 'u8[8192]{0}', space=vmem, size = 0x2000, scoped, tag = 'output window, operand 0, single buffered']
    %14 = vsyncpa [#allocation3], 0
    %15 = vsyncpa [#allocation6], 0
    %16 = vsyncpa [#allocation9], 0
    %17 = vsyncpa [#allocation4], 0
    // Predicated region
    $region2: #{tpu_custom_call.1} parent=1 // pred_check
      _
    $region3: #{tpu_custom_call.1} parent=1 // pred_check_branch
      %19 = sbr.rel (0) target = $region5
    $region4: #{tpu_custom_call.1} parent=1 // pred_region
      _
    $region5: #{tpu_custom_call.1} parent=1 // pred_fallthru
      _
    // Predicated region
    $region6: #{tpu_custom_call.1} parent=1 // pred_check
      _
    $region7: #{tpu_custom_call.1} parent=1 // pred_check_branch
      %21 = sbr.rel (0) target = $region9
    $region8: #{tpu_custom_call.1} parent=1 // pred_region
      _
    $region9: #{tpu_custom_call.1} parent=1 // pred_fallthru
      _
    // Predicated region
    $region10: #{tpu_custom_call.1} parent=1 // pred_check
      _
    $region11: #{tpu_custom_call.1} parent=1 // pred_check_branch
      %23 = sbr.rel (0) target = $region13
    $region12: #{tpu_custom_call.1} parent=1 // pred_region
      %s25 = ssub.s32 2048, 2048
      %26 = vsyncadd [#allocation3], %s25
      %s27 = sshll.u32 [#allocation2], 4
      %s28 = int_to_ptr.vmem [resolvable:$true] %s27
      %33 = dma.hbm_to_vmem [thread:$0]  %s2, 2048, %s28, [#allocation3], 128, 128, 8
    $region13: #{tpu_custom_call.1} parent=1 // pred_fallthru
      _
    // Predicated region
    $region14: #{tpu_custom_call.1} parent=1 // pred_check
      _
    $region15: #{tpu_custom_call.1} parent=1 // pred_check_branch
      %35 = sbr.rel (0) target = $region17
    $region16: #{tpu_custom_call.1} parent=1 // pred_region
      _
    $region17: #{tpu_custom_call.1} parent=1 // pred_fallthru
      _
    // Predicated region
    $region18: #{tpu_custom_call.1} parent=1 // pred_check
      _
    $region19: #{tpu_custom_call.1} parent=1 // pred_check_branch
      %37 = sbr.rel (0) target = $region21
    $region20: #{tpu_custom_call.1} parent=1 // pred_region
      %s39 = ssub.s32 2048, 2048
      %40 = vsyncadd [#allocation6], %s39
      %s41 = sshll.u32 [#allocation5], 4
      %s42 = int_to_ptr.vmem [resolvable:$true] %s41
      %47 = dma.hbm_to_vmem [thread:$0]  %s4, 2048, %s42, [#allocation6], 128, 128, 8
    $region21: #{tpu_custom_call.1} parent=1 // pred_fallthru
      _
    // Predicated region
    $region22: #{tpu_custom_call.1} parent=1 // pred_check
      _
    $region23: #{tpu_custom_call.1} parent=1 // pred_check_branch
      %49 = sbr.rel (0) target = $region25
    $region24: #{tpu_custom_call.1} parent=1 // pred_region
      %s51 = ssub.s32 2048, 2048
      %52 = vsyncadd [#allocation6], %s51
      %s53 = sshll.u32 [#allocation7], 4
      %s54 = int_to_ptr.vmem [resolvable:$true] %s53
      %59 = dma.hbm_to_vmem [thread:$0]  %s5, 2048, %s54, [#allocation6], 128, 128, 8
    $region25: #{tpu_custom_call.1} parent=1 // pred_fallthru
      _
    // Predicated region
    $region26: #{tpu_custom_call.1} parent=1 // pred_check
      _
    $region27: #{tpu_custom_call.1} parent=1 // pred_check_branch
      %61 = sbr.rel (0) target = $region29
    $region28: #{tpu_custom_call.1} parent=1 // pred_region
      _
    $region29: #{tpu_custom_call.1} parent=1 // pred_fallthru
      _
    // Predicated region
    $region30: #{tpu_custom_call.1} parent=1 // pred_check
      _
    $region31: #{tpu_custom_call.1} parent=1 // pred_check_branch
      %63 = sbr.rel (0) target = $region33
    $region32: #{tpu_custom_call.1} parent=1 // pred_region
      %s65 = ssub.s32 2048, 2048
      %66 = vsyncadd [#allocation9], %s65
      %s67 = sshll.u32 [#allocation8], 4
      %s68 = int_to_ptr.vmem [resolvable:$true] %s67
      %73 = dma.hbm_to_vmem [thread:$0]  %s7, 2048, %s68, [#allocation9], 128, 128, 8
    $region33: #{tpu_custom_call.1} parent=1 // pred_fallthru
      _
    // Predicated region
    $region34: #{tpu_custom_call.1} parent=1 // pred_check
      _
    $region35: #{tpu_custom_call.1} parent=1 // pred_check_branch
      %75 = sbr.rel (0) target = $region37
    $region36: #{tpu_custom_call.1} parent=1 // pred_region
      _
    $region37: #{tpu_custom_call.1} parent=1 // pred_fallthru
      _
    // Predicated region
    $region38: #{tpu_custom_call.1} parent=1 // pred_check
      _
    $region39: #{tpu_custom_call.1} parent=1 // pred_check_branch
      %77 = sbr.rel (0) target = $region41
    $region40: #{tpu_custom_call.1} parent=1 // pred_region
      %78 = dma.done [#allocation3], 2048
    $region41: #{tpu_custom_call.1} parent=1 // pred_fallthru
      _
    // Predicated region
    $region42: #{tpu_custom_call.1} parent=1 // pred_check
      _
    $region43: #{tpu_custom_call.1} parent=1 // pred_check_branch
      %80 = sbr.rel (0) target = $region45
    $region44: #{tpu_custom_call.1} parent=1 // pred_region
      %81 = dma.done [#allocation6], 2048
    $region45: #{tpu_custom_call.1} parent=1 // pred_fallthru
      _
    // Predicated region
    $region46: #{tpu_custom_call.1} parent=1 // pred_check
      _
    $region47: #{tpu_custom_call.1} parent=1 // pred_check_branch
      %83 = sbr.rel (0) target = $region49
    $region48: #{tpu_custom_call.1} parent=1 // pred_region
      %84 = dma.done [#allocation6], 2048
    $region49: #{tpu_custom_call.1} parent=1 // pred_fallthru
      _
    // Predicated region
    $region50: #{tpu_custom_call.1} parent=1 // pred_check
      _
    $region51: #{tpu_custom_call.1} parent=1 // pred_check_branch
      %86 = sbr.rel (0) target = $region53
    $region52: #{tpu_custom_call.1} parent=1 // pred_region
      %87 = dma.done [#allocation9], 2048
    $region53: #{tpu_custom_call.1} parent=1 // pred_fallthru
      _
    %v88 = vlaneseq
    %v89 = vand.u32 %v88, 127
    %vm90 = vcmp.ge.s32.totalorder %v89, 96
    %v91 = vld [vmem:[%s1] sm:$0xff]
    %v92 = vld [vmem:[%s3] sm:$0x1]
    %v93 = vld [vmem:[%s0] sm:$0xff]
    %v94 = vld [vmem:[%s0 + $0x8] sm:$0xff]
    %v95 = vld [vmem:[%s0 + $0x10] sm:$0xff]
    %v96 = vld [vmem:[%s0 + $0x18] sm:$0xff]
    %v97 = vld [vmem:[%s0 + $0x20] sm:$0xff]
    %v98 = vld [vmem:[%s0 + $0x28] sm:$0xff]
    %v99 = vld [vmem:[%s0 + $0x30] sm:$0xff]
    %v100 = vld [vmem:[%s0 + $0x38] sm:$0xff]
    %v102 = vlaneseq
    %v103 = vshrl.u32 %v102, 7
    %v104 = vsub.s32 0, %v103
    %v105 = vrot.slane %v92, %v104
    %vm107 = vcmask 64512
    %v109 = vsel %vm107, %v93, 0
    %v112 = vsel %vm107, %v94, 0
    %v115 = vsel %vm107, %v95, 0
    %v118 = vsel %vm107, %v96, 0
    %v121 = vsel %vm107, %v97, 0
    %v124 = vsel %vm107, %v98, 0
    %v127 = vsel %vm107, %v99, 0
    %v130 = vsel %vm107, %v100, 0
    %132 = vmatprep.subr.mxu0 0.0
    %133 = vmatpush1.msra.mxu0 0.0
    %134 = vmatprep.subr.mxu0 0.0
    %135 = vmatpush1.msra.mxu0 0.0
    %136 = vmatprep.subr.mxu0 0.0
    %137 = vmatpush1.msra.mxu0 0.0
    %138 = vmatprep.subr.mxu0 0.0
    %139 = vmatpush1.msra.mxu0 0.0
    %140 = vmatprep.subr.mxu0 0.0
    %141 = vmatpush1.msra.mxu0 0.0
    %142 = vmatprep.subr.mxu0 0.0
    %143 = vmatpush1.msra.mxu0 0.0
    %144 = vmatprep.subr.mxu0 0.0
    %145 = vmatpush1.msra.mxu0 0.0
    %146 = vmatprep.subr.mxu0 0.0
    %147 = vmatpush1.msra.mxu0 0.0
    %148 = vmatprep.subr.mxu0 0.0
    %149 = vmatpush1.msra.mxu0 0.0
    %150 = vmatprep.subr.mxu0 0.0
    %151 = vmatpush1.msra.mxu0 0.0
    %152 = vmatprep.subr.mxu0 0.0
    %153 = vmatpush1.msra.mxu0 0.0
    %154 = vmatprep.subr.mxu0 0.0
    %155 = vmatpush1.msra.mxu0 0.0
    %156 = vmatprep.subr.mxu0 0.0
    %157 = vmatpush1.msra.mxu0 0.0
    %158 = vmatprep.subr.mxu0 0.0
    %159 = vmatpush1.msra.mxu0 0.0
    %160 = vmatprep.subr.mxu0 0.0
    %161 = vmatpush1.msra.mxu0 0.0
    %162 = vmatprep.subr.mxu0 0.0
    %163 = vmatpush1.msra.mxu0 %v91
    %164 = vmatprep.subr.mxu0 0.0
    %165 = vmatpush2.msra.mxu0 0.0
    %166 = vmatprep.subr.mxu0 0.0
    %167 = vmatpush2.msra.mxu0 0.0
    %168 = vmatprep.subr.mxu0 0.0
    %169 = vmatpush2.msra.mxu0 0.0
    %170 = vmatprep.subr.mxu0 0.0
    %171 = vmatpush2.msra.mxu0 0.0
    %172 = vmatprep.subr.mxu0 0.0
    %173 = vmatpush2.msra.mxu0 0.0
    %174 = vmatprep.subr.mxu0 0.0
    %175 = vmatpush2.msra.mxu0 0.0
    %176 = vmatprep.subr.mxu0 0.0
    %177 = vmatpush2.msra.mxu0 0.0
    %178 = vmatprep.subr.mxu0 0.0
    %179 = vmatpush2.msra.mxu0 0.0
    %180 = vmatprep.subr.mxu0 0.0
    %181 = vmatpush2.msra.mxu0 0.0
    %182 = vmatprep.subr.mxu0 0.0
    %183 = vmatpush2.msra.mxu0 0.0
    %184 = vmatprep.subr.mxu0 0.0
    %185 = vmatpush2.msra.mxu0 0.0
    %186 = vmatprep.subr.mxu0 0.0
    %187 = vmatpush2.msra.mxu0 0.0
    %188 = vmatprep.subr.mxu0 0.0
    %189 = vmatpush2.msra.mxu0 0.0
    %190 = vmatprep.subr.mxu0 0.0
    %191 = vmatpush2.msra.mxu0 0.0
    %192 = vmatprep.subr.mxu0 0.0
    %193 = vmatpush2.msra.mxu0 0.0
    %194 = vmatprep.subr.mxu0 0.0
    %195 = vmatpush2.msra.mxu0 0.0
    %196 = vmatprep.mubr.f32.mxu0 0.0
    %197 = vmatmul.mubr.f32.gmra.mxu0 %v109
    %v198 = vpop.f32.mrf.mxu0
    %v199 = vadd.f32 %v105, %v198
    %v200 = vpop.f32.mrf.mxu0
    %201 = vmatprep.mubr.f32.mxu0 0.0
    %202 = vmatmul.mubr.f32.gmra.mxu0 %v112
    %v203 = vpop.f32.mrf.mxu0
    %v204 = vadd.f32 %v105, %v203
    %v205 = vpop.f32.mrf.mxu0
    %206 = vmatprep.mubr.f32.mxu0 0.0
    %207 = vmatmul.mubr.f32.gmra.mxu0 %v115
    %v208 = vpop.f32.mrf.mxu0
    %v209 = vadd.f32 %v105, %v208
    %v210 = vpop.f32.mrf.mxu0
    %211 = vmatprep.mubr.f32.mxu0 0.0
    %212 = vmatmul.mubr.f32.gmra.mxu0 %v118
    %v213 = vpop.f32.mrf.mxu0
    %v214 = vadd.f32 %v105, %v213
    %v215 = vpop.f32.mrf.mxu0
    %216 = vmatprep.mubr.f32.mxu0 0.0
    %217 = vmatmul.mubr.f32.gmra.mxu0 %v121
    %v218 = vpop.f32.mrf.mxu0
    %v219 = vadd.f32 %v105, %v218
    %v220 = vpop.f32.mrf.mxu0
    %221 = vmatprep.mubr.f32.mxu0 0.0
    %222 = vmatmul.mubr.f32.gmra.mxu0 %v124
    %v223 = vpop.f32.mrf.mxu0
    %v224 = vadd.f32 %v105, %v223
    %v225 = vpop.f32.mrf.mxu0
    %226 = vmatprep.mubr.f32.mxu0 0.0
    %227 = vmatmul.mubr.f32.gmra.mxu0 %v127
    %v228 = vpop.f32.mrf.mxu0
    %v229 = vadd.f32 %v105, %v228
    %v230 = vpop.f32.mrf.mxu0
    %231 = vmatprep.mubr.f32.mxu0 0.0
    %232 = vmatmul.mubr.f32.gmra.mxu0 %v130
    %v233 = vpop.f32.mrf.mxu0
    %v234 = vadd.f32 %v105, %v233
    %v235 = vpop.f32.mrf.mxu0
    %236 = vdwg.mxu0
    %v237 = vld [vmem:[#allocation5] sm:$0xff]
    %v238 = vld [vmem:[#allocation5 + $0x8] sm:$0xff]
    %v239 = vld [vmem:[#allocation5 + $0x10] sm:$0xff]
    %v240 = vld [vmem:[#allocation5 + $0x18] sm:$0xff]
    %v241 = vld [vmem:[#allocation5 + $0x20] sm:$0xff]
    %v242 = vld [vmem:[#allocation5 + $0x28] sm:$0xff]
    %v243 = vld [vmem:[#allocation5 + $0x30] sm:$0xff]
    %v244 = vld [vmem:[#allocation5 + $0x38] sm:$0xff]
    %v245 = vld [vmem:[#allocation5 + $0x40] sm:$0xff]
    %v246 = vld [vmem:[#allocation5 + $0x48] sm:$0xff]
    %v247 = vld [vmem:[#allocation5 + $0x50] sm:$0xff]
    %v248 = vld [vmem:[#allocation5 + $0x58] sm:$0xff]
    %v249 = vld [vmem:[#allocation5 + $0x60] sm:$0xff]
    %v250 = vld [vmem:[#allocation5 + $0x68] sm:$0xff]
    %v251 = vld [vmem:[#allocation5 + $0x70] sm:$0xff]
    %v252 = vld [vmem:[#allocation5 + $0x78] sm:$0xff]
    %v253 = vld [vmem:[#allocation2] sm:$0xff]
    %v254 = vld [vmem:[#allocation2 + $0x8] sm:$0xff]
    %v255 = vld [vmem:[#allocation2 + $0x10] sm:$0xff]
    %v256 = vld [vmem:[#allocation2 + $0x18] sm:$0xff]
    %v257 = vld [vmem:[#allocation2 + $0x20] sm:$0xff]
    %v258 = vld [vmem:[#allocation2 + $0x28] sm:$0xff]
    %v259 = vld [vmem:[#allocation2 + $0x30] sm:$0xff]
    %v260 = vld [vmem:[#allocation2 + $0x38] sm:$0xff]
    %v261 = vld [vmem:[#allocation2 + $0x40] sm:$0xff]
    %v262 = vld [vmem:[#allocation2 + $0x48] sm:$0xff]
    %v263 = vld [vmem:[#allocation2 + $0x50] sm:$0xff]
    %v264 = vld [vmem:[#allocation2 + $0x58] sm:$0xff]
    %v265 = vld [vmem:[#allocation2 + $0x60] sm:$0xff]
    %v266 = vld [vmem:[#allocation2 + $0x68] sm:$0xff]
    %v267 = vld [vmem:[#allocation2 + $0x70] sm:$0xff]
    %v268 = vld [vmem:[#allocation2 + $0x78] sm:$0xff]
    %v269 = vld [vmem:[#allocation7] sm:$0xff]
    %v270 = vld [vmem:[#allocation7 + $0x8] sm:$0xff]
    %v271 = vld [vmem:[#allocation7 + $0x10] sm:$0xff]
    %v272 = vld [vmem:[#allocation7 + $0x18] sm:$0xff]
    %v273 = vld [vmem:[#allocation7 + $0x20] sm:$0xff]
    %v274 = vld [vmem:[#allocation7 + $0x28] sm:$0xff]
    %v275 = vld [vmem:[#allocation7 + $0x30] sm:$0xff]
    %v276 = vld [vmem:[#allocation7 + $0x38] sm:$0xff]
    %v277 = vld [vmem:[#allocation7 + $0x40] sm:$0xff]
    %v278 = vld [vmem:[#allocation7 + $0x48] sm:$0xff]
    %v279 = vld [vmem:[#allocation7 + $0x50] sm:$0xff]
    %v280 = vld [vmem:[#allocation7 + $0x58] sm:$0xff]
    %v281 = vld [vmem:[#allocation7 + $0x60] sm:$0xff]
    %v282 = vld [vmem:[#allocation7 + $0x68] sm:$0xff]
    %v283 = vld [vmem:[#allocation7 + $0x70] sm:$0xff]
    %v284 = vld [vmem:[#allocation7 + $0x78] sm:$0xff]
    %v285 = vld [vmem:[%s6] sm:$0x1]
    %286 = vmatprep.subr.mxu0 0.0
    %287 = vmatpush1.msra.mxu0 %v268
    %288 = vmatprep.subr.mxu0 0.0
    %289 = vmatpush1.msra.mxu0 %v267
    %290 = vmatprep.subr.mxu0 0.0
    %291 = vmatpush1.msra.mxu0 %v266
    %292 = vmatprep.subr.mxu0 0.0
    %293 = vmatpush1.msra.mxu0 %v265
    %294 = vmatprep.subr.mxu0 0.0
    %295 = vmatpush1.msra.mxu0 %v264
    %296 = vmatprep.subr.mxu0 0.0
    %297 = vmatpush1.msra.mxu0 %v263
    %298 = vmatprep.subr.mxu0 0.0
    %299 = vmatpush1.msra.mxu0 %v262
    %300 = vmatprep.subr.mxu0 0.0
    %301 = vmatpush1.msra.mxu0 %v261
    %302 = vmatprep.subr.mxu0 0.0
    %303 = vmatpush1.msra.mxu0 %v260
    %304 = vmatprep.subr.mxu0 0.0
    %305 = vmatpush1.msra.mxu0 %v259
    %306 = vmatprep.subr.mxu0 0.0
    %307 = vmatpush1.msra.mxu0 %v258
    %308 = vmatprep.subr.mxu0 0.0
    %309 = vmatpush1.msra.mxu0 %v257
    %310 = vmatprep.subr.mxu0 0.0
    %311 = vmatpush1.msra.mxu0 %v256
    %312 = vmatprep.subr.mxu0 0.0
    %313 = vmatpush1.msra.mxu0 %v255
    %314 = vmatprep.subr.mxu0 0.0
    %315 = vmatpush1.msra.mxu0 %v254
    %316 = vmatprep.subr.mxu0 0.0
    %317 = vmatpush1.msra.mxu0 %v253
    %318 = vmatprep.subr.mxu0 0.0
    %319 = vmatpush2.msra.mxu0 0.0
    %320 = vmatprep.subr.mxu0 0.0
    %321 = vmatpush2.msra.mxu0 0.0
    %322 = vmatprep.subr.mxu0 0.0
    %323 = vmatpush2.msra.mxu0 0.0
    %324 = vmatprep.subr.mxu0 0.0
    %325 = vmatpush2.msra.mxu0 0.0
    %326 = vmatprep.subr.mxu0 0.0
    %327 = vmatpush2.msra.mxu0 0.0
    %328 = vmatprep.subr.mxu0 0.0
    %329 = vmatpush2.msra.mxu0 0.0
    %330 = vmatprep.subr.mxu0 0.0
    %331 = vmatpush2.msra.mxu0 0.0
    %332 = vmatprep.subr.mxu0 0.0
    %333 = vmatpush2.msra.mxu0 0.0
    %334 = vmatprep.subr.mxu0 0.0
    %335 = vmatpush2.msra.mxu0 0.0
    %336 = vmatprep.subr.mxu0 0.0
    %337 = vmatpush2.msra.mxu0 0.0
    %338 = vmatprep.subr.mxu0 0.0
    %339 = vmatpush2.msra.mxu0 0.0
    %340 = vmatprep.subr.mxu0 0.0
    %341 = vmatpush2.msra.mxu0 0.0
    %342 = vmatprep.subr.mxu0 0.0
    %343 = vmatpush2.msra.mxu0 0.0
    %344 = vmatprep.subr.mxu0 0.0
    %345 = vmatpush2.msra.mxu0 0.0
    %346 = vmatprep.subr.mxu0 0.0
    %347 = vmatpush2.msra.mxu0 0.0
    %348 = vmatprep.subr.mxu0 0.0
    %349 = vmatpush2.msra.mxu0 0.0
    %350 = vmatprep.mubr.f32.mxu0 0.0
    %351 = vmatmul.mubr.f32.gmra.mxu0 0.0
    %v352 = vpop.f32.mrf.mxu0
    %v353 = vadd.f32 0.0, %v352
    %v354 = vpop.f32.mrf.mxu0
    %355 = vdwg.mxu0
    %v356 = vadd.f32 %v199, %v353
    %v357 = vtanh.pop %v356
    %v358 = vxor.u32 %v356, 2147483648
    %v359 = vmul.f32 %v358, 1.442695
    %v360 = vpow.pop %v359
    %v361 = vadd.f32 %v360, 1.0
    %v362 = vrcp.pop %v361
    %v363 = vmul.f32 1.0, %v362
    %v364 = vsel %vm90, %v357, %v363
    %365 = vrot.lane.b32.xlu0 %v364, 64
    %v366 = vpop.permute.xlu0 %365
    %v367 = vmul.f32 %v364, %v366
    %368 = vrot.lane.b32.xlu0 %v367, 32
    %v369 = vpop.permute.xlu0 %368
    %v370 = vmul.f32 %v364, 0.0
    %v371 = vadd.f32 %v370, %v369
    %v372 = vtanh.pop %v371
    %v373 = vmul.f32 %v366, %v372
    %v375 = vlaneseq
    %v376 = vshrl.u32 %v375, 7
    %v377 = vsub.s32 0, %v376
    %v378 = vrot.slane %v285, %v377
    %380 = vmatprep.subr.mxu0 0.0
    %381 = vmatpush1.msra.mxu0 %v252
    %382 = vmatprep.subr.mxu0 0.0
    %383 = vmatpush1.msra.mxu0 %v251
    %384 = vmatprep.subr.mxu0 0.0
    %385 = vmatpush1.msra.mxu0 %v250
    %386 = vmatprep.subr.mxu0 0.0
    %387 = vmatpush1.msra.mxu0 %v249
    %388 = vmatprep.subr.mxu0 0.0
    %389 = vmatpush1.msra.mxu0 %v248
    %390 = vmatprep.subr.mxu0 0.0
    %391 = vmatpush1.msra.mxu0 %v247
    %392 = vmatprep.subr.mxu0 0.0
    %393 = vmatpush1.msra.mxu0 %v246
    %394 = vmatprep.subr.mxu0 0.0
    %395 = vmatpush1.msra.mxu0 %v245
    %396 = vmatprep.subr.mxu0 0.0
    %397 = vmatpush1.msra.mxu0 %v244
    %398 = vmatprep.subr.mxu0 0.0
    %399 = vmatpush1.msra.mxu0 %v243
    %400 = vmatprep.subr.mxu0 0.0
    %401 = vmatpush1.msra.mxu0 %v242
    %402 = vmatprep.subr.mxu0 0.0
    %403 = vmatpush1.msra.mxu0 %v241
    %404 = vmatprep.subr.mxu0 0.0
    %405 = vmatpush1.msra.mxu0 %v240
    %406 = vmatprep.subr.mxu0 0.0
    %407 = vmatpush1.msra.mxu0 %v239
    %408 = vmatprep.subr.mxu0 0.0
    %409 = vmatpush1.msra.mxu0 %v238
    %410 = vmatprep.subr.mxu0 0.0
    %411 = vmatpush1.msra.mxu0 %v237
    %412 = vmatprep.subr.mxu0 0.0
    %413 = vmatpush2.msra.mxu0 0.0
    %414 = vmatprep.subr.mxu0 0.0
    %415 = vmatpush2.msra.mxu0 0.0
    %416 = vmatprep.subr.mxu0 0.0
    %417 = vmatpush2.msra.mxu0 0.0
    %418 = vmatprep.subr.mxu0 0.0
    %419 = vmatpush2.msra.mxu0 0.0
    %420 = vmatprep.subr.mxu0 0.0
    %421 = vmatpush2.msra.mxu0 0.0
    %422 = vmatprep.subr.mxu0 0.0
    %423 = vmatpush2.msra.mxu0 0.0
    %424 = vmatprep.subr.mxu0 0.0
    %425 = vmatpush2.msra.mxu0 0.0
    %426 = vmatprep.subr.mxu0 0.0
    %427 = vmatpush2.msra.mxu0 0.0
    %428 = vmatprep.subr.mxu0 0.0
    %429 = vmatpush2.msra.mxu0 0.0
    %430 = vmatprep.subr.mxu0 0.0
    %431 = vmatpush2.msra.mxu0 0.0
    %432 = vmatprep.subr.mxu0 0.0
    %433 = vmatpush2.msra.mxu0 0.0
    %434 = vmatprep.subr.mxu0 0.0
    %435 = vmatpush2.msra.mxu0 0.0
    %436 = vmatprep.subr.mxu0 0.0
    %437 = vmatpush2.msra.mxu0 0.0
    %438 = vmatprep.subr.mxu0 0.0
    %439 = vmatpush2.msra.mxu0 0.0
    %440 = vmatprep.subr.mxu0 0.0
    %441 = vmatpush2.msra.mxu0 0.0
    %442 = vmatprep.subr.mxu0 0.0
    %443 = vmatpush2.msra.mxu0 0.0
    %444 = vmatprep.mubr.f32.mxu0 0.0
    %445 = vmatmul.mubr.f32.gmra.mxu0 %v373
    %v446 = vpop.f32.mrf.mxu0
    %v447 = vadd.f32 %v378, %v446
    %v448 = vpop.f32.mrf.mxu0
    %449 = vdwg.mxu0
    %450 = vmatprep.subr.mxu0 0.0
    %451 = vmatpush1.msra.mxu0 %v284
    %452 = vmatprep.subr.mxu0 0.0
    %453 = vmatpush1.msra.mxu0 %v283
    %454 = vmatprep.subr.mxu0 0.0
    %455 = vmatpush1.msra.mxu0 %v282
    %456 = vmatprep.subr.mxu0 0.0
    %457 = vmatpush1.msra.mxu0 %v281
    %458 = vmatprep.subr.mxu0 0.0
    %459 = vmatpush1.msra.mxu0 %v280
    %460 = vmatprep.subr.mxu0 0.0
    %461 = vmatpush1.msra.mxu0 %v279
    %462 = vmatprep.subr.mxu0 0.0
    %463 = vmatpush1.msra.mxu0 %v278
    %464 = vmatprep.subr.mxu0 0.0
    %465 = vmatpush1.msra.mxu0 %v277
    %466 = vmatprep.subr.mxu0 0.0
    %467 = vmatpush1.msra.mxu0 %v276
    %468 = vmatprep.subr.mxu0 0.0
    %469 = vmatpush1.msra.mxu0 %v275
    %470 = vmatprep.subr.mxu0 0.0
    %471 = vmatpush1.msra.mxu0 %v274
    %472 = vmatprep.subr.mxu0 0.0
    %473 = vmatpush1.msra.mxu0 %v273
    %474 = vmatprep.subr.mxu0 0.0
    %475 = vmatpush1.msra.mxu0 %v272
    %476 = vmatprep.subr.mxu0 0.0
    %477 = vmatpush1.msra.mxu0 %v271
    %478 = vmatprep.subr.mxu0 0.0
    %479 = vmatpush1.msra.mxu0 %v270
    %480 = vmatprep.subr.mxu0 0.0
    %481 = vmatpush1.msra.mxu0 %v269
    %482 = vmatprep.subr.mxu0 0.0
    %483 = vmatpush2.msra.mxu0 0.0
    %484 = vmatprep.subr.mxu0 0.0
    %485 = vmatpush2.msra.mxu0 0.0
    %486 = vmatprep.subr.mxu0 0.0
    %487 = vmatpush2.msra.mxu0 0.0
    %488 = vmatprep.subr.mxu0 0.0
    %489 = vmatpush2.msra.mxu0 0.0
    %490 = vmatprep.subr.mxu0 0.0
    %491 = vmatpush2.msra.mxu0 0.0
    %492 = vmatprep.subr.mxu0 0.0
    %493 = vmatpush2.msra.mxu0 0.0
    %494 = vmatprep.subr.mxu0 0.0
    %495 = vmatpush2.msra.mxu0 0.0
    %496 = vmatprep.subr.mxu0 0.0
    %497 = vmatpush2.msra.mxu0 0.0
    %498 = vmatprep.subr.mxu0 0.0
    %499 = vmatpush2.msra.mxu0 0.0
    %500 = vmatprep.subr.mxu0 0.0
    %501 = vmatpush2.msra.mxu0 0.0
    %502 = vmatprep.subr.mxu0 0.0
    %503 = vmatpush2.msra.mxu0 0.0
    %504 = vmatprep.subr.mxu0 0.0
    %505 = vmatpush2.msra.mxu0 0.0
    %506 = vmatprep.subr.mxu0 0.0
    %507 = vmatpush2.msra.mxu0 0.0
    %508 = vmatprep.subr.mxu0 0.0
    %509 = vmatpush2.msra.mxu0 0.0
    %510 = vmatprep.subr.mxu0 0.0
    %511 = vmatpush2.msra.mxu0 0.0
    %512 = vmatprep.subr.mxu0 0.0
    %513 = vmatpush2.msra.mxu0 0.0
    %514 = vmatprep.mubr.f32.mxu0 0.0
    %515 = vmatmul.mubr.f32.gmra.mxu0 0.0
    %v516 = vpop.f32.mrf.mxu0
    %v517 = vadd.f32 0.0, %v516
    %v518 = vpop.f32.mrf.mxu0
    %519 = vdwg.mxu0
    %v520 = vadd.f32 %v447, %v517
    %v521 = vtanh.pop %v520
    %v522 = vxor.u32 %v520, 2147483648
    %v523 = vmul.f32 %v522, 1.442695
    %v524 = vpow.pop %v523
    %v525 = vadd.f32 %v524, 1.0
    %v526 = vrcp.pop %v525
    %v527 = vmul.f32 1.0, %v526
    %v528 = vsel %vm90, %v521, %v527
    %529 = vrot.lane.b32.xlu0 %v528, 64
    %v530 = vpop.permute.xlu0 %529
    %v531 = vmul.f32 %v528, %v530
    %532 = vrot.lane.b32.xlu0 %v531, 32
    %v533 = vpop.permute.xlu0 %532
    %v534 = vmul.f32 %v528, 0.0
    %v535 = vadd.f32 %v534, %v533
    %v536 = vtanh.pop %v535
    %v537 = vmul.f32 %v530, %v536
    %538 = vmatprep.subr.mxu0 0.0
    %539 = vmatpush1.msra.mxu0 %v268
    %540 = vmatprep.subr.mxu0 0.0
    %541 = vmatpush1.msra.mxu0 %v267
    %542 = vmatprep.subr.mxu0 0.0
    %543 = vmatpush1.msra.mxu0 %v266
    %544 = vmatprep.subr.mxu0 0.0
    %545 = vmatpush1.msra.mxu0 %v265
    %546 = vmatprep.subr.mxu0 0.0
    %547 = vmatpush1.msra.mxu0 %v264
    %548 = vmatprep.subr.mxu0 0.0
    %549 = vmatpush1.msra.mxu0 %v263
    %550 = vmatprep.subr.mxu0 0.0
    %551 = vmatpush1.msra.mxu0 %v262
    %552 = vmatprep.subr.mxu0 0.0
    %553 = vmatpush1.msra.mxu0 %v261
    %554 = vmatprep.subr.mxu0 0.0
    %555 = vmatpush1.msra.mxu0 %v260
    %556 = vmatprep.subr.mxu0 0.0
    %557 = vmatpush1.msra.mxu0 %v259
    %558 = vmatprep.subr.mxu0 0.0
    %559 = vmatpush1.msra.mxu0 %v258
    %560 = vmatprep.subr.mxu0 0.0
    %561 = vmatpush1.msra.mxu0 %v257
    %562 = vmatprep.subr.mxu0 0.0
    %563 = vmatpush1.msra.mxu0 %v256
    %564 = vmatprep.subr.mxu0 0.0
    %565 = vmatpush1.msra.mxu0 %v255
    %566 = vmatprep.subr.mxu0 0.0
    %567 = vmatpush1.msra.mxu0 %v254
    %568 = vmatprep.subr.mxu0 0.0
    %569 = vmatpush1.msra.mxu0 %v253
    %570 = vmatprep.subr.mxu0 0.0
    %571 = vmatpush2.msra.mxu0 0.0
    %572 = vmatprep.subr.mxu0 0.0
    %573 = vmatpush2.msra.mxu0 0.0
    %574 = vmatprep.subr.mxu0 0.0
    %575 = vmatpush2.msra.mxu0 0.0
    %576 = vmatprep.subr.mxu0 0.0
    %577 = vmatpush2.msra.mxu0 0.0
    %578 = vmatprep.subr.mxu0 0.0
    %579 = vmatpush2.msra.mxu0 0.0
    %580 = vmatprep.subr.mxu0 0.0
    %581 = vmatpush2.msra.mxu0 0.0
    %582 = vmatprep.subr.mxu0 0.0
    %583 = vmatpush2.msra.mxu0 0.0
    %584 = vmatprep.subr.mxu0 0.0
    %585 = vmatpush2.msra.mxu0 0.0
    %586 = vmatprep.subr.mxu0 0.0
    %587 = vmatpush2.msra.mxu0 0.0
    %588 = vmatprep.subr.mxu0 0.0
    %589 = vmatpush2.msra.mxu0 0.0
    %590 = vmatprep.subr.mxu0 0.0
    %591 = vmatpush2.msra.mxu0 0.0
    %592 = vmatprep.subr.mxu0 0.0
    %593 = vmatpush2.msra.mxu0 0.0
    %594 = vmatprep.subr.mxu0 0.0
    %595 = vmatpush2.msra.mxu0 0.0
    %596 = vmatprep.subr.mxu0 0.0
    %597 = vmatpush2.msra.mxu0 0.0
    %598 = vmatprep.subr.mxu0 0.0
    %599 = vmatpush2.msra.mxu0 0.0
    %600 = vmatprep.subr.mxu0 0.0
    %601 = vmatpush2.msra.mxu0 0.0
    %602 = vmatprep.mubr.f32.mxu0 0.0
    %603 = vmatmul.mubr.f32.gmra.mxu0 %v373
    %v604 = vpop.f32.mrf.mxu0
    %v605 = vadd.f32 0.0, %v604
    %v606 = vpop.f32.mrf.mxu0
    %607 = vdwg.mxu0
    %v608 = vadd.f32 %v204, %v605
    %v609 = vtanh.pop %v608
    %v610 = vxor.u32 %v608, 2147483648
    %v611 = vmul.f32 %v610, 1.442695
    %v612 = vpow.pop %v611
    %v613 = vadd.f32 %v612, 1.0
    %v614 = vrcp.pop %v613
    %v615 = vmul.f32 1.0, %v614
    %v616 = vsel %vm90, %v609, %v615
    %617 = vrot.lane.b32.xlu0 %v616, 64
    %v618 = vpop.permute.xlu0 %617
    %v619 = vmul.f32 %v616, %v618
    %620 = vrot.lane.b32.xlu0 %v619, 32
    %v621 = vpop.permute.xlu0 %620
    %v622 = vmul.f32 %v616, %v371
    %v623 = vadd.f32 %v622, %v621
    %v624 = vtanh.pop %v623
    %v625 = vmul.f32 %v618, %v624
    %626 = vmatprep.subr.mxu0 0.0
    %627 = vmatpush1.msra.mxu0 %v252
    %628 = vmatprep.subr.mxu0 0.0
    %629 = vmatpush1.msra.mxu0 %v251
    %630 = vmatprep.subr.mxu0 0.0
    %631 = vmatpush1.msra.mxu0 %v250
    %632 = vmatprep.subr.mxu0 0.0
    %633 = vmatpush1.msra.mxu0 %v249
    %634 = vmatprep.subr.mxu0 0.0
    %635 = vmatpush1.msra.mxu0 %v248
    %636 = vmatprep.subr.mxu0 0.0
    %637 = vmatpush1.msra.mxu0 %v247
    %638 = vmatprep.subr.mxu0 0.0
    %639 = vmatpush1.msra.mxu0 %v246
    %640 = vmatprep.subr.mxu0 0.0
    %641 = vmatpush1.msra.mxu0 %v245
    %642 = vmatprep.subr.mxu0 0.0
    %643 = vmatpush1.msra.mxu0 %v244
    %644 = vmatprep.subr.mxu0 0.0
    %645 = vmatpush1.msra.mxu0 %v243
    %646 = vmatprep.subr.mxu0 0.0
    %647 = vmatpush1.msra.mxu0 %v242
    %648 = vmatprep.subr.mxu0 0.0
    %649 = vmatpush1.msra.mxu0 %v241
    %650 = vmatprep.subr.mxu0 0.0
    %651 = vmatpush1.msra.mxu0 %v240
    %652 = vmatprep.subr.mxu0 0.0
    %653 = vmatpush1.msra.mxu0 %v239
    %654 = vmatprep.subr.mxu0 0.0
    %655 = vmatpush1.msra.mxu0 %v238
    %656 = vmatprep.subr.mxu0 0.0
    %657 = vmatpush1.msra.mxu0 %v237
    %658 = vmatprep.subr.mxu0 0.0
    %659 = vmatpush2.msra.mxu0 0.0
    %660 = vmatprep.subr.mxu0 0.0
    %661 = vmatpush2.msra.mxu0 0.0
    %662 = vmatprep.subr.mxu0 0.0
    %663 = vmatpush2.msra.mxu0 0.0
    %664 = vmatprep.subr.mxu0 0.0
    %665 = vmatpush2.msra.mxu0 0.0
    %666 = vmatprep.subr.mxu0 0.0
    %667 = vmatpush2.msra.mxu0 0.0
    %668 = vmatprep.subr.mxu0 0.0
    %669 = vmatpush2.msra.mxu0 0.0
    %670 = vmatprep.subr.mxu0 0.0
    %671 = vmatpush2.msra.mxu0 0.0
    %672 = vmatprep.subr.mxu0 0.0
    %673 = vmatpush2.msra.mxu0 0.0
    %674 = vmatprep.subr.mxu0 0.0
    %675 = vmatpush2.msra.mxu0 0.0
    %676 = vmatprep.subr.mxu0 0.0
    %677 = vmatpush2.msra.mxu0 0.0
    %678 = vmatprep.subr.mxu0 0.0
    %679 = vmatpush2.msra.mxu0 0.0
    %680 = vmatprep.subr.mxu0 0.0
    %681 = vmatpush2.msra.mxu0 0.0
    %682 = vmatprep.subr.mxu0 0.0
    %683 = vmatpush2.msra.mxu0 0.0
    %684 = vmatprep.subr.mxu0 0.0
    %685 = vmatpush2.msra.mxu0 0.0
    %686 = vmatprep.subr.mxu0 0.0
    %687 = vmatpush2.msra.mxu0 0.0
    %688 = vmatprep.subr.mxu0 0.0
    %689 = vmatpush2.msra.mxu0 0.0
    %690 = vmatprep.mubr.f32.mxu0 0.0
    %691 = vmatmul.mubr.f32.gmra.mxu0 %v625
    %v692 = vpop.f32.mrf.mxu0
    %v693 = vadd.f32 %v378, %v692
    %v694 = vpop.f32.mrf.mxu0
    %695 = vdwg.mxu0
    %696 = vmatprep.subr.mxu0 0.0
    %697 = vmatpush1.msra.mxu0 %v284
    %698 = vmatprep.subr.mxu0 0.0
    %699 = vmatpush1.msra.mxu0 %v283
    %700 = vmatprep.subr.mxu0 0.0
    %701 = vmatpush1.msra.mxu0 %v282
    %702 = vmatprep.subr.mxu0 0.0
    %703 = vmatpush1.msra.mxu0 %v281
    %704 = vmatprep.subr.mxu0 0.0
    %705 = vmatpush1.msra.mxu0 %v280
    %706 = vmatprep.subr.mxu0 0.0
    %707 = vmatpush1.msra.mxu0 %v279
    %708 = vmatprep.subr.mxu0 0.0
    %709 = vmatpush1.msra.mxu0 %v278
    %710 = vmatprep.subr.mxu0 0.0
    %711 = vmatpush1.msra.mxu0 %v277
    %712 = vmatprep.subr.mxu0 0.0
    %713 = vmatpush1.msra.mxu0 %v276
    %714 = vmatprep.subr.mxu0 0.0
    %715 = vmatpush1.msra.mxu0 %v275
    %716 = vmatprep.subr.mxu0 0.0
    %717 = vmatpush1.msra.mxu0 %v274
    %718 = vmatprep.subr.mxu0 0.0
    %719 = vmatpush1.msra.mxu0 %v273
    %720 = vmatprep.subr.mxu0 0.0
    %721 = vmatpush1.msra.mxu0 %v272
    %722 = vmatprep.subr.mxu0 0.0
    %723 = vmatpush1.msra.mxu0 %v271
    %724 = vmatprep.subr.mxu0 0.0
    %725 = vmatpush1.msra.mxu0 %v270
    %726 = vmatprep.subr.mxu0 0.0
    %727 = vmatpush1.msra.mxu0 %v269
    %728 = vmatprep.subr.mxu0 0.0
    %729 = vmatpush2.msra.mxu0 0.0
    %730 = vmatprep.subr.mxu0 0.0
    %731 = vmatpush2.msra.mxu0 0.0
    %732 = vmatprep.subr.mxu0 0.0
    %733 = vmatpush2.msra.mxu0 0.0
    %734 = vmatprep.subr.mxu0 0.0
    %735 = vmatpush2.msra.mxu0 0.0
    %736 = vmatprep.subr.mxu0 0.0
    %737 = vmatpush2.msra.mxu0 0.0
    %738 = vmatprep.subr.mxu0 0.0
    %739 = vmatpush2.msra.mxu0 0.0
    %740 = vmatprep.subr.mxu0 0.0
    %741 = vmatpush2.msra.mxu0 0.0
    %742 = vmatprep.subr.mxu0 0.0
    %743 = vmatpush2.msra.mxu0 0.0
    %744 = vmatprep.subr.mxu0 0.0
    %745 = vmatpush2.msra.mxu0 0.0
    %746 = vmatprep.subr.mxu0 0.0
    %747 = vmatpush2.msra.mxu0 0.0
    %748 = vmatprep.subr.mxu0 0.0
    %749 = vmatpush2.msra.mxu0 0.0
    %750 = vmatprep.subr.mxu0 0.0
    %751 = vmatpush2.msra.mxu0 0.0
    %752 = vmatprep.subr.mxu0 0.0
    %753 = vmatpush2.msra.mxu0 0.0
    %754 = vmatprep.subr.mxu0 0.0
    %755 = vmatpush2.msra.mxu0 0.0
    %756 = vmatprep.subr.mxu0 0.0
    %757 = vmatpush2.msra.mxu0 0.0
    %758 = vmatprep.subr.mxu0 0.0
    %759 = vmatpush2.msra.mxu0 0.0
    %760 = vmatprep.mubr.f32.mxu0 0.0
    %761 = vmatmul.mubr.f32.gmra.mxu0 %v537
    %v762 = vpop.f32.mrf.mxu0
    %v763 = vadd.f32 0.0, %v762
    %v764 = vpop.f32.mrf.mxu0
    %765 = vdwg.mxu0
    %v766 = vadd.f32 %v693, %v763
    %v767 = vtanh.pop %v766
    %v768 = vxor.u32 %v766, 2147483648
    %v769 = vmul.f32 %v768, 1.442695
    %v770 = vpow.pop %v769
    %v771 = vadd.f32 %v770, 1.0
    %v772 = vrcp.pop %v771
    %v773 = vmul.f32 1.0, %v772
    %v774 = vsel %vm90, %v767, %v773
    %775 = vrot.lane.b32.xlu0 %v774, 64
    %v776 = vpop.permute.xlu0 %775
    %v777 = vmul.f32 %v774, %v776
    %778 = vrot.lane.b32.xlu0 %v777, 32
    %v779 = vpop.permute.xlu0 %778
    %v780 = vmul.f32 %v774, %v535
    %v781 = vadd.f32 %v780, %v779
    %v782 = vtanh.pop %v781
    %v783 = vmul.f32 %v776, %v782
    %784 = vmatprep.subr.mxu0 0.0
    %785 = vmatpush1.msra.mxu0 %v268
    %786 = vmatprep.subr.mxu0 0.0
    %787 = vmatpush1.msra.mxu0 %v267
    %788 = vmatprep.subr.mxu0 0.0
    %789 = vmatpush1.msra.mxu0 %v266
    %790 = vmatprep.subr.mxu0 0.0
    %791 = vmatpush1.msra.mxu0 %v265
    %792 = vmatprep.subr.mxu0 0.0
    %793 = vmatpush1.msra.mxu0 %v264
    %794 = vmatprep.subr.mxu0 0.0
    %795 = vmatpush1.msra.mxu0 %v263
    %796 = vmatprep.subr.mxu0 0.0
    %797 = vmatpush1.msra.mxu0 %v262
    %798 = vmatprep.subr.mxu0 0.0
    %799 = vmatpush1.msra.mxu0 %v261
    %800 = vmatprep.subr.mxu0 0.0
    %801 = vmatpush1.msra.mxu0 %v260
    %802 = vmatprep.subr.mxu0 0.0
    %803 = vmatpush1.msra.mxu0 %v259
    %804 = vmatprep.subr.mxu0 0.0
    %805 = vmatpush1.msra.mxu0 %v258
    %806 = vmatprep.subr.mxu0 0.0
    %807 = vmatpush1.msra.mxu0 %v257
    %808 = vmatprep.subr.mxu0 0.0
    %809 = vmatpush1.msra.mxu0 %v256
    %810 = vmatprep.subr.mxu0 0.0
    %811 = vmatpush1.msra.mxu0 %v255
    %812 = vmatprep.subr.mxu0 0.0
    %813 = vmatpush1.msra.mxu0 %v254
    %814 = vmatprep.subr.mxu0 0.0
    %815 = vmatpush1.msra.mxu0 %v253
    %816 = vmatprep.subr.mxu0 0.0
    %817 = vmatpush2.msra.mxu0 0.0
    %818 = vmatprep.subr.mxu0 0.0
    %819 = vmatpush2.msra.mxu0 0.0
    %820 = vmatprep.subr.mxu0 0.0
    %821 = vmatpush2.msra.mxu0 0.0
    %822 = vmatprep.subr.mxu0 0.0
    %823 = vmatpush2.msra.mxu0 0.0
    %824 = vmatprep.subr.mxu0 0.0
    %825 = vmatpush2.msra.mxu0 0.0
    %826 = vmatprep.subr.mxu0 0.0
    %827 = vmatpush2.msra.mxu0 0.0
    %828 = vmatprep.subr.mxu0 0.0
    %829 = vmatpush2.msra.mxu0 0.0
    %830 = vmatprep.subr.mxu0 0.0
    %831 = vmatpush2.msra.mxu0 0.0
    %832 = vmatprep.subr.mxu0 0.0
    %833 = vmatpush2.msra.mxu0 0.0
    %834 = vmatprep.subr.mxu0 0.0
    %835 = vmatpush2.msra.mxu0 0.0
    %836 = vmatprep.subr.mxu0 0.0
    %837 = vmatpush2.msra.mxu0 0.0
    %838 = vmatprep.subr.mxu0 0.0
    %839 = vmatpush2.msra.mxu0 0.0
    %840 = vmatprep.subr.mxu0 0.0
    %841 = vmatpush2.msra.mxu0 0.0
    %842 = vmatprep.subr.mxu0 0.0
    %843 = vmatpush2.msra.mxu0 0.0
    %844 = vmatprep.subr.mxu0 0.0
    %845 = vmatpush2.msra.mxu0 0.0
    %846 = vmatprep.subr.mxu0 0.0
    %847 = vmatpush2.msra.mxu0 0.0
    %848 = vmatprep.mubr.f32.mxu0 0.0
    %849 = vmatmul.mubr.f32.gmra.mxu0 %v625
    %v850 = vpop.f32.mrf.mxu0
    %v851 = vadd.f32 0.0, %v850
    %v852 = vpop.f32.mrf.mxu0
    %853 = vdwg.mxu0
    %v854 = vadd.f32 %v209, %v851
    %v855 = vtanh.pop %v854
    %v856 = vxor.u32 %v854, 2147483648
    %v857 = vmul.f32 %v856, 1.442695
    %v858 = vpow.pop %v857
    %v859 = vadd.f32 %v858, 1.0
    %v860 = vrcp.pop %v859
    %v861 = vmul.f32 1.0, %v860
    %v862 = vsel %vm90, %v855, %v861
    %863 = vrot.lane.b32.xlu0 %v862, 64
    %v864 = vpop.permute.xlu0 %863
    %v865 = vmul.f32 %v862, %v864
    %866 = vrot.lane.b32.xlu0 %v865, 32
    %v867 = vpop.permute.xlu0 %866
    %v868 = vmul.f32 %v862, %v623
    %v869 = vadd.f32 %v868, %v867
    %v870 = vtanh.pop %v869
    %v871 = vmul.f32 %v864, %v870
    %872 = vmatprep.subr.mxu0 0.0
    %873 = vmatpush1.msra.mxu0 %v252
    %874 = vmatprep.subr.mxu0 0.0
    %875 = vmatpush1.msra.mxu0 %v251
    %876 = vmatprep.subr.mxu0 0.0
    %877 = vmatpush1.msra.mxu0 %v250
    %878 = vmatprep.subr.mxu0 0.0
    %879 = vmatpush1.msra.mxu0 %v249
    %880 = vmatprep.subr.mxu0 0.0
    %881 = vmatpush1.msra.mxu0 %v248
    %882 = vmatprep.subr.mxu0 0.0
    %883 = vmatpush1.msra.mxu0 %v247
    %884 = vmatprep.subr.mxu0 0.0
    %885 = vmatpush1.msra.mxu0 %v246
    %886 = vmatprep.subr.mxu0 0.0
    %887 = vmatpush1.msra.mxu0 %v245
    %888 = vmatprep.subr.mxu0 0.0
    %889 = vmatpush1.msra.mxu0 %v244
    %890 = vmatprep.subr.mxu0 0.0
    %891 = vmatpush1.msra.mxu0 %v243
    %892 = vmatprep.subr.mxu0 0.0
    %893 = vmatpush1.msra.mxu0 %v242
    %894 = vmatprep.subr.mxu0 0.0
    %895 = vmatpush1.msra.mxu0 %v241
    %896 = vmatprep.subr.mxu0 0.0
    %897 = vmatpush1.msra.mxu0 %v240
    %898 = vmatprep.subr.mxu0 0.0
    %899 = vmatpush1.msra.mxu0 %v239
    %900 = vmatprep.subr.mxu0 0.0
    %901 = vmatpush1.msra.mxu0 %v238
    %902 = vmatprep.subr.mxu0 0.0
    %903 = vmatpush1.msra.mxu0 %v237
    %904 = vmatprep.subr.mxu0 0.0
    %905 = vmatpush2.msra.mxu0 0.0
    %906 = vmatprep.subr.mxu0 0.0
    %907 = vmatpush2.msra.mxu0 0.0
    %908 = vmatprep.subr.mxu0 0.0
    %909 = vmatpush2.msra.mxu0 0.0
    %910 = vmatprep.subr.mxu0 0.0
    %911 = vmatpush2.msra.mxu0 0.0
    %912 = vmatprep.subr.mxu0 0.0
    %913 = vmatpush2.msra.mxu0 0.0
    %914 = vmatprep.subr.mxu0 0.0
    %915 = vmatpush2.msra.mxu0 0.0
    %916 = vmatprep.subr.mxu0 0.0
    %917 = vmatpush2.msra.mxu0 0.0
    %918 = vmatprep.subr.mxu0 0.0
    %919 = vmatpush2.msra.mxu0 0.0
    %920 = vmatprep.subr.mxu0 0.0
    %921 = vmatpush2.msra.mxu0 0.0
    %922 = vmatprep.subr.mxu0 0.0
    %923 = vmatpush2.msra.mxu0 0.0
    %924 = vmatprep.subr.mxu0 0.0
    %925 = vmatpush2.msra.mxu0 0.0
    %926 = vmatprep.subr.mxu0 0.0
    %927 = vmatpush2.msra.mxu0 0.0
    %928 = vmatprep.subr.mxu0 0.0
    %929 = vmatpush2.msra.mxu0 0.0
    %930 = vmatprep.subr.mxu0 0.0
    %931 = vmatpush2.msra.mxu0 0.0
    %932 = vmatprep.subr.mxu0 0.0
    %933 = vmatpush2.msra.mxu0 0.0
    %934 = vmatprep.subr.mxu0 0.0
    %935 = vmatpush2.msra.mxu0 0.0
    %936 = vmatprep.mubr.f32.mxu0 0.0
    %937 = vmatmul.mubr.f32.gmra.mxu0 %v871
    %v938 = vpop.f32.mrf.mxu0
    %v939 = vadd.f32 %v378, %v938
    %v940 = vpop.f32.mrf.mxu0
    %941 = vdwg.mxu0
    %942 = vmatprep.subr.mxu0 0.0
    %943 = vmatpush1.msra.mxu0 %v284
    %944 = vmatprep.subr.mxu0 0.0
    %945 = vmatpush1.msra.mxu0 %v283
    %946 = vmatprep.subr.mxu0 0.0
    %947 = vmatpush1.msra.mxu0 %v282
    %948 = vmatprep.subr.mxu0 0.0
    %949 = vmatpush1.msra.mxu0 %v281
    %950 = vmatprep.subr.mxu0 0.0
    %951 = vmatpush1.msra.mxu0 %v280
    %952 = vmatprep.subr.mxu0 0.0
    %953 = vmatpush1.msra.mxu0 %v279
    %954 = vmatprep.subr.mxu0 0.0
    %955 = vmatpush1.msra.mxu0 %v278
    %956 = vmatprep.subr.mxu0 0.0
    %957 = vmatpush1.msra.mxu0 %v277
    %958 = vmatprep.subr.mxu0 0.0
    %959 = vmatpush1.msra.mxu0 %v276
    %960 = vmatprep.subr.mxu0 0.0
    %961 = vmatpush1.msra.mxu0 %v275
    %962 = vmatprep.subr.mxu0 0.0
    %963 = vmatpush1.msra.mxu0 %v274
    %964 = vmatprep.subr.mxu0 0.0
    %965 = vmatpush1.msra.mxu0 %v273
    %966 = vmatprep.subr.mxu0 0.0
    %967 = vmatpush1.msra.mxu0 %v272
    %968 = vmatprep.subr.mxu0 0.0
    %969 = vmatpush1.msra.mxu0 %v271
    %970 = vmatprep.subr.mxu0 0.0
    %971 = vmatpush1.msra.mxu0 %v270
    %972 = vmatprep.subr.mxu0 0.0
    %973 = vmatpush1.msra.mxu0 %v269
    %974 = vmatprep.subr.mxu0 0.0
    %975 = vmatpush2.msra.mxu0 0.0
    %976 = vmatprep.subr.mxu0 0.0
    %977 = vmatpush2.msra.mxu0 0.0
    %978 = vmatprep.subr.mxu0 0.0
    %979 = vmatpush2.msra.mxu0 0.0
    %980 = vmatprep.subr.mxu0 0.0
    %981 = vmatpush2.msra.mxu0 0.0
    %982 = vmatprep.subr.mxu0 0.0
    %983 = vmatpush2.msra.mxu0 0.0
    %984 = vmatprep.subr.mxu0 0.0
    %985 = vmatpush2.msra.mxu0 0.0
    %986 = vmatprep.subr.mxu0 0.0
    %987 = vmatpush2.msra.mxu0 0.0
    %988 = vmatprep.subr.mxu0 0.0
    %989 = vmatpush2.msra.mxu0 0.0
    %990 = vmatprep.subr.mxu0 0.0
    %991 = vmatpush2.msra.mxu0 0.0
    %992 = vmatprep.subr.mxu0 0.0
    %993 = vmatpush2.msra.mxu0 0.0
    %994 = vmatprep.subr.mxu0 0.0
    %995 = vmatpush2.msra.mxu0 0.0
    %996 = vmatprep.subr.mxu0 0.0
    %997 = vmatpush2.msra.mxu0 0.0
    %998 = vmatprep.subr.mxu0 0.0
    %999 = vmatpush2.msra.mxu0 0.0
    %1000 = vmatprep.subr.mxu0 0.0
    %1001 = vmatpush2.msra.mxu0 0.0
    %1002 = vmatprep.subr.mxu0 0.0
    %1003 = vmatpush2.msra.mxu0 0.0
    %1004 = vmatprep.subr.mxu0 0.0
    %1005 = vmatpush2.msra.mxu0 0.0
    %1006 = vmatprep.mubr.f32.mxu0 0.0
    %1007 = vmatmul.mubr.f32.gmra.mxu0 %v783
    %v1008 = vpop.f32.mrf.mxu0
    %v1009 = vadd.f32 0.0, %v1008
    %v1010 = vpop.f32.mrf.mxu0
    %1011 = vdwg.mxu0
    %v1012 = vadd.f32 %v939, %v1009
    %v1013 = vtanh.pop %v1012
    %v1014 = vxor.u32 %v1012, 2147483648
    %v1015 = vmul.f32 %v1014, 1.442695
    %v1016 = vpow.pop %v1015
    %v1017 = vadd.f32 %v1016, 1.0
    %v1018 = vrcp.pop %v1017
    %v1019 = vmul.f32 1.0, %v1018
    %v1020 = vsel %vm90, %v1013, %v1019
    %1021 = vrot.lane.b32.xlu0 %v1020, 64
    %v1022 = vpop.permute.xlu0 %1021
    %v1023 = vmul.f32 %v1020, %v1022
    %1024 = vrot.lane.b32.xlu0 %v1023, 32
    %v1025 = vpop.permute.xlu0 %1024
    %v1026 = vmul.f32 %v1020, %v781
    %v1027 = vadd.f32 %v1026, %v1025
    %v1028 = vtanh.pop %v1027
    %v1029 = vmul.f32 %v1022, %v1028
    %1030 = vmatprep.subr.mxu0 0.0
    %1031 = vmatpush1.msra.mxu0 %v268
    %1032 = vmatprep.subr.mxu0 0.0
    %1033 = vmatpush1.msra.mxu0 %v267
    %1034 = vmatprep.subr.mxu0 0.0
    %1035 = vmatpush1.msra.mxu0 %v266
    %1036 = vmatprep.subr.mxu0 0.0
    %1037 = vmatpush1.msra.mxu0 %v265
    %1038 = vmatprep.subr.mxu0 0.0
    %1039 = vmatpush1.msra.mxu0 %v264
    %1040 = vmatprep.subr.mxu0 0.0
    %1041 = vmatpush1.msra.mxu0 %v263
    %1042 = vmatprep.subr.mxu0 0.0
    %1043 = vmatpush1.msra.mxu0 %v262
    %1044 = vmatprep.subr.mxu0 0.0
    %1045 = vmatpush1.msra.mxu0 %v261
    %1046 = vmatprep.subr.mxu0 0.0
    %1047 = vmatpush1.msra.mxu0 %v260
    %1048 = vmatprep.subr.mxu0 0.0
    %1049 = vmatpush1.msra.mxu0 %v259
    %1050 = vmatprep.subr.mxu0 0.0
    %1051 = vmatpush1.msra.mxu0 %v258
    %1052 = vmatprep.subr.mxu0 0.0
    %1053 = vmatpush1.msra.mxu0 %v257
    %1054 = vmatprep.subr.mxu0 0.0
    %1055 = vmatpush1.msra.mxu0 %v256
    %1056 = vmatprep.subr.mxu0 0.0
    %1057 = vmatpush1.msra.mxu0 %v255
    %1058 = vmatprep.subr.mxu0 0.0
    %1059 = vmatpush1.msra.mxu0 %v254
    %1060 = vmatprep.subr.mxu0 0.0
    %1061 = vmatpush1.msra.mxu0 %v253
    %1062 = vmatprep.subr.mxu0 0.0
    %1063 = vmatpush2.msra.mxu0 0.0
    %1064 = vmatprep.subr.mxu0 0.0
    %1065 = vmatpush2.msra.mxu0 0.0
    %1066 = vmatprep.subr.mxu0 0.0
    %1067 = vmatpush2.msra.mxu0 0.0
    %1068 = vmatprep.subr.mxu0 0.0
    %1069 = vmatpush2.msra.mxu0 0.0
    %1070 = vmatprep.subr.mxu0 0.0
    %1071 = vmatpush2.msra.mxu0 0.0
    %1072 = vmatprep.subr.mxu0 0.0
    %1073 = vmatpush2.msra.mxu0 0.0
    %1074 = vmatprep.subr.mxu0 0.0
    %1075 = vmatpush2.msra.mxu0 0.0
    %1076 = vmatprep.subr.mxu0 0.0
    %1077 = vmatpush2.msra.mxu0 0.0
    %1078 = vmatprep.subr.mxu0 0.0
    %1079 = vmatpush2.msra.mxu0 0.0
    %1080 = vmatprep.subr.mxu0 0.0
    %1081 = vmatpush2.msra.mxu0 0.0
    %1082 = vmatprep.subr.mxu0 0.0
    %1083 = vmatpush2.msra.mxu0 0.0
    %1084 = vmatprep.subr.mxu0 0.0
    %1085 = vmatpush2.msra.mxu0 0.0
    %1086 = vmatprep.subr.mxu0 0.0
    %1087 = vmatpush2.msra.mxu0 0.0
    %1088 = vmatprep.subr.mxu0 0.0
    %1089 = vmatpush2.msra.mxu0 0.0
    %1090 = vmatprep.subr.mxu0 0.0
    %1091 = vmatpush2.msra.mxu0 0.0
    %1092 = vmatprep.subr.mxu0 0.0
    %1093 = vmatpush2.msra.mxu0 0.0
    %1094 = vmatprep.mubr.f32.mxu0 0.0
    %1095 = vmatmul.mubr.f32.gmra.mxu0 %v871
    %v1096 = vpop.f32.mrf.mxu0
    %v1097 = vadd.f32 0.0, %v1096
    %v1098 = vpop.f32.mrf.mxu0
    %1099 = vdwg.mxu0
    %v1100 = vadd.f32 %v214, %v1097
    %v1101 = vtanh.pop %v1100
    %v1102 = vxor.u32 %v1100, 2147483648
    %v1103 = vmul.f32 %v1102, 1.442695
    %v1104 = vpow.pop %v1103
    %v1105 = vadd.f32 %v1104, 1.0
    %v1106 = vrcp.pop %v1105
    %v1107 = vmul.f32 1.0, %v1106
    %v1108 = vsel %vm90, %v1101, %v1107
    %1109 = vrot.lane.b32.xlu0 %v1108, 64
    %v1110 = vpop.permute.xlu0 %1109
    %v1111 = vmul.f32 %v1108, %v1110
    %1112 = vrot.lane.b32.xlu0 %v1111, 32
    %v1113 = vpop.permute.xlu0 %1112
    %v1114 = vmul.f32 %v1108, %v869
    %v1115 = vadd.f32 %v1114, %v1113
    %v1116 = vtanh.pop %v1115
    %v1117 = vmul.f32 %v1110, %v1116
    %1118 = vmatprep.subr.mxu0 0.0
    %1119 = vmatpush1.msra.mxu0 %v252
    %1120 = vmatprep.subr.mxu0 0.0
    %1121 = vmatpush1.msra.mxu0 %v251
    %1122 = vmatprep.subr.mxu0 0.0
    %1123 = vmatpush1.msra.mxu0 %v250
    %1124 = vmatprep.subr.mxu0 0.0
    %1125 = vmatpush1.msra.mxu0 %v249
    %1126 = vmatprep.subr.mxu0 0.0
    %1127 = vmatpush1.msra.mxu0 %v248
    %1128 = vmatprep.subr.mxu0 0.0
    %1129 = vmatpush1.msra.mxu0 %v247
    %1130 = vmatprep.subr.mxu0 0.0
    %1131 = vmatpush1.msra.mxu0 %v246
    %1132 = vmatprep.subr.mxu0 0.0
    %1133 = vmatpush1.msra.mxu0 %v245
    %1134 = vmatprep.subr.mxu0 0.0
    %1135 = vmatpush1.msra.mxu0 %v244
    %1136 = vmatprep.subr.mxu0 0.0
    %1137 = vmatpush1.msra.mxu0 %v243
    %1138 = vmatprep.subr.mxu0 0.0
    %1139 = vmatpush1.msra.mxu0 %v242
    %1140 = vmatprep.subr.mxu0 0.0
    %1141 = vmatpush1.msra.mxu0 %v241
    %1142 = vmatprep.subr.mxu0 0.0
    %1143 = vmatpush1.msra.mxu0 %v240
    %1144 = vmatprep.subr.mxu0 0.0
    %1145 = vmatpush1.msra.mxu0 %v239
    %1146 = vmatprep.subr.mxu0 0.0
    %1147 = vmatpush1.msra.mxu0 %v238
    %1148 = vmatprep.subr.mxu0 0.0
    %1149 = vmatpush1.msra.mxu0 %v237
    %1150 = vmatprep.subr.mxu0 0.0
    %1151 = vmatpush2.msra.mxu0 0.0
    %1152 = vmatprep.subr.mxu0 0.0
    %1153 = vmatpush2.msra.mxu0 0.0
    %1154 = vmatprep.subr.mxu0 0.0
    %1155 = vmatpush2.msra.mxu0 0.0
    %1156 = vmatprep.subr.mxu0 0.0
    %1157 = vmatpush2.msra.mxu0 0.0
    %1158 = vmatprep.subr.mxu0 0.0
    %1159 = vmatpush2.msra.mxu0 0.0
    %1160 = vmatprep.subr.mxu0 0.0
    %1161 = vmatpush2.msra.mxu0 0.0
    %1162 = vmatprep.subr.mxu0 0.0
    %1163 = vmatpush2.msra.mxu0 0.0
    %1164 = vmatprep.subr.mxu0 0.0
    %1165 = vmatpush2.msra.mxu0 0.0
    %1166 = vmatprep.subr.mxu0 0.0
    %1167 = vmatpush2.msra.mxu0 0.0
    %1168 = vmatprep.subr.mxu0 0.0
    %1169 = vmatpush2.msra.mxu0 0.0
    %1170 = vmatprep.subr.mxu0 0.0
    %1171 = vmatpush2.msra.mxu0 0.0
    %1172 = vmatprep.subr.mxu0 0.0
    %1173 = vmatpush2.msra.mxu0 0.0
    %1174 = vmatprep.subr.mxu0 0.0
    %1175 = vmatpush2.msra.mxu0 0.0
    %1176 = vmatprep.subr.mxu0 0.0
    %1177 = vmatpush2.msra.mxu0 0.0
    %1178 = vmatprep.subr.mxu0 0.0
    %1179 = vmatpush2.msra.mxu0 0.0
    %1180 = vmatprep.subr.mxu0 0.0
    %1181 = vmatpush2.msra.mxu0 0.0
    %1182 = vmatprep.mubr.f32.mxu0 0.0
    %1183 = vmatmul.mubr.f32.gmra.mxu0 %v1117
    %v1184 = vpop.f32.mrf.mxu0
    %v1185 = vadd.f32 %v378, %v1184
    %v1186 = vpop.f32.mrf.mxu0
    %1187 = vdwg.mxu0
    %1188 = vmatprep.subr.mxu0 0.0
    %1189 = vmatpush1.msra.mxu0 %v284
    %1190 = vmatprep.subr.mxu0 0.0
    %1191 = vmatpush1.msra.mxu0 %v283
    %1192 = vmatprep.subr.mxu0 0.0
    %1193 = vmatpush1.msra.mxu0 %v282
    %1194 = vmatprep.subr.mxu0 0.0
    %1195 = vmatpush1.msra.mxu0 %v281
    %1196 = vmatprep.subr.mxu0 0.0
    %1197 = vmatpush1.msra.mxu0 %v280
    %1198 = vmatprep.subr.mxu0 0.0
    %1199 = vmatpush1.msra.mxu0 %v279
    %1200 = vmatprep.subr.mxu0 0.0
    %1201 = vmatpush1.msra.mxu0 %v278
    %1202 = vmatprep.subr.mxu0 0.0
    %1203 = vmatpush1.msra.mxu0 %v277
    %1204 = vmatprep.subr.mxu0 0.0
    %1205 = vmatpush1.msra.mxu0 %v276
    %1206 = vmatprep.subr.mxu0 0.0
    %1207 = vmatpush1.msra.mxu0 %v275
    %1208 = vmatprep.subr.mxu0 0.0
    %1209 = vmatpush1.msra.mxu0 %v274
    %1210 = vmatprep.subr.mxu0 0.0
    %1211 = vmatpush1.msra.mxu0 %v273
    %1212 = vmatprep.subr.mxu0 0.0
    %1213 = vmatpush1.msra.mxu0 %v272
    %1214 = vmatprep.subr.mxu0 0.0
    %1215 = vmatpush1.msra.mxu0 %v271
    %1216 = vmatprep.subr.mxu0 0.0
    %1217 = vmatpush1.msra.mxu0 %v270
    %1218 = vmatprep.subr.mxu0 0.0
    %1219 = vmatpush1.msra.mxu0 %v269
    %1220 = vmatprep.subr.mxu0 0.0
    %1221 = vmatpush2.msra.mxu0 0.0
    %1222 = vmatprep.subr.mxu0 0.0
    %1223 = vmatpush2.msra.mxu0 0.0
    %1224 = vmatprep.subr.mxu0 0.0
    %1225 = vmatpush2.msra.mxu0 0.0
    %1226 = vmatprep.subr.mxu0 0.0
    %1227 = vmatpush2.msra.mxu0 0.0
    %1228 = vmatprep.subr.mxu0 0.0
    %1229 = vmatpush2.msra.mxu0 0.0
    %1230 = vmatprep.subr.mxu0 0.0
    %1231 = vmatpush2.msra.mxu0 0.0
    %1232 = vmatprep.subr.mxu0 0.0
    %1233 = vmatpush2.msra.mxu0 0.0
    %1234 = vmatprep.subr.mxu0 0.0
    %1235 = vmatpush2.msra.mxu0 0.0
    %1236 = vmatprep.subr.mxu0 0.0
    %1237 = vmatpush2.msra.mxu0 0.0
    %1238 = vmatprep.subr.mxu0 0.0
    %1239 = vmatpush2.msra.mxu0 0.0
    %1240 = vmatprep.subr.mxu0 0.0
    %1241 = vmatpush2.msra.mxu0 0.0
    %1242 = vmatprep.subr.mxu0 0.0
    %1243 = vmatpush2.msra.mxu0 0.0
    %1244 = vmatprep.subr.mxu0 0.0
    %1245 = vmatpush2.msra.mxu0 0.0
    %1246 = vmatprep.subr.mxu0 0.0
    %1247 = vmatpush2.msra.mxu0 0.0
    %1248 = vmatprep.subr.mxu0 0.0
    %1249 = vmatpush2.msra.mxu0 0.0
    %1250 = vmatprep.subr.mxu0 0.0
    %1251 = vmatpush2.msra.mxu0 0.0
    %1252 = vmatprep.mubr.f32.mxu0 0.0
    %1253 = vmatmul.mubr.f32.gmra.mxu0 %v1029
    %v1254 = vpop.f32.mrf.mxu0
    %v1255 = vadd.f32 0.0, %v1254
    %v1256 = vpop.f32.mrf.mxu0
    %1257 = vdwg.mxu0
    %v1258 = vadd.f32 %v1185, %v1255
    %v1259 = vtanh.pop %v1258
    %v1260 = vxor.u32 %v1258, 2147483648
    %v1261 = vmul.f32 %v1260, 1.442695
    %v1262 = vpow.pop %v1261
    %v1263 = vadd.f32 %v1262, 1.0
    %v1264 = vrcp.pop %v1263
    %v1265 = vmul.f32 1.0, %v1264
    %v1266 = vsel %vm90, %v1259, %v1265
    %1267 = vrot.lane.b32.xlu0 %v1266, 64
    %v1268 = vpop.permute.xlu0 %1267
    %v1269 = vmul.f32 %v1266, %v1268
    %1270 = vrot.lane.b32.xlu0 %v1269, 32
    %v1271 = vpop.permute.xlu0 %1270
    %v1272 = vmul.f32 %v1266, %v1027
    %v1273 = vadd.f32 %v1272, %v1271
    %v1274 = vtanh.pop %v1273
    %v1275 = vmul.f32 %v1268, %v1274
    %1276 = vmatprep.subr.mxu0 0.0
    %1277 = vmatpush1.msra.mxu0 %v268
    %1278 = vmatprep.subr.mxu0 0.0
    %1279 = vmatpush1.msra.mxu0 %v267
    %1280 = vmatprep.subr.mxu0 0.0
    %1281 = vmatpush1.msra.mxu0 %v266
    %1282 = vmatprep.subr.mxu0 0.0
    %1283 = vmatpush1.msra.mxu0 %v265
    %1284 = vmatprep.subr.mxu0 0.0
    %1285 = vmatpush1.msra.mxu0 %v264
    %1286 = vmatprep.subr.mxu0 0.0
    %1287 = vmatpush1.msra.mxu0 %v263
    %1288 = vmatprep.subr.mxu0 0.0
    %1289 = vmatpush1.msra.mxu0 %v262
    %1290 = vmatprep.subr.mxu0 0.0
    %1291 = vmatpush1.msra.mxu0 %v261
    %1292 = vmatprep.subr.mxu0 0.0
    %1293 = vmatpush1.msra.mxu0 %v260
    %1294 = vmatprep.subr.mxu0 0.0
    %1295 = vmatpush1.msra.mxu0 %v259
    %1296 = vmatprep.subr.mxu0 0.0
    %1297 = vmatpush1.msra.mxu0 %v258
    %1298 = vmatprep.subr.mxu0 0.0
    %1299 = vmatpush1.msra.mxu0 %v257
    %1300 = vmatprep.subr.mxu0 0.0
    %1301 = vmatpush1.msra.mxu0 %v256
    %1302 = vmatprep.subr.mxu0 0.0
    %1303 = vmatpush1.msra.mxu0 %v255
    %1304 = vmatprep.subr.mxu0 0.0
    %1305 = vmatpush1.msra.mxu0 %v254
    %1306 = vmatprep.subr.mxu0 0.0
    %1307 = vmatpush1.msra.mxu0 %v253
    %1308 = vmatprep.subr.mxu0 0.0
    %1309 = vmatpush2.msra.mxu0 0.0
    %1310 = vmatprep.subr.mxu0 0.0
    %1311 = vmatpush2.msra.mxu0 0.0
    %1312 = vmatprep.subr.mxu0 0.0
    %1313 = vmatpush2.msra.mxu0 0.0
    %1314 = vmatprep.subr.mxu0 0.0
    %1315 = vmatpush2.msra.mxu0 0.0
    %1316 = vmatprep.subr.mxu0 0.0
    %1317 = vmatpush2.msra.mxu0 0.0
    %1318 = vmatprep.subr.mxu0 0.0
    %1319 = vmatpush2.msra.mxu0 0.0
    %1320 = vmatprep.subr.mxu0 0.0
    %1321 = vmatpush2.msra.mxu0 0.0
    %1322 = vmatprep.subr.mxu0 0.0
    %1323 = vmatpush2.msra.mxu0 0.0
    %1324 = vmatprep.subr.mxu0 0.0
    %1325 = vmatpush2.msra.mxu0 0.0
    %1326 = vmatprep.subr.mxu0 0.0
    %1327 = vmatpush2.msra.mxu0 0.0
    %1328 = vmatprep.subr.mxu0 0.0
    %1329 = vmatpush2.msra.mxu0 0.0
    %1330 = vmatprep.subr.mxu0 0.0
    %1331 = vmatpush2.msra.mxu0 0.0
    %1332 = vmatprep.subr.mxu0 0.0
    %1333 = vmatpush2.msra.mxu0 0.0
    %1334 = vmatprep.subr.mxu0 0.0
    %1335 = vmatpush2.msra.mxu0 0.0
    %1336 = vmatprep.subr.mxu0 0.0
    %1337 = vmatpush2.msra.mxu0 0.0
    %1338 = vmatprep.subr.mxu0 0.0
    %1339 = vmatpush2.msra.mxu0 0.0
    %1340 = vmatprep.mubr.f32.mxu0 0.0
    %1341 = vmatmul.mubr.f32.gmra.mxu0 %v1117
    %v1342 = vpop.f32.mrf.mxu0
    %v1343 = vadd.f32 0.0, %v1342
    %v1344 = vpop.f32.mrf.mxu0
    %1345 = vdwg.mxu0
    %v1346 = vadd.f32 %v219, %v1343
    %v1347 = vtanh.pop %v1346
    %v1348 = vxor.u32 %v1346, 2147483648
    %v1349 = vmul.f32 %v1348, 1.442695
    %v1350 = vpow.pop %v1349
    %v1351 = vadd.f32 %v1350, 1.0
    %v1352 = vrcp.pop %v1351
    %v1353 = vmul.f32 1.0, %v1352
    %v1354 = vsel %vm90, %v1347, %v1353
    %1355 = vrot.lane.b32.xlu0 %v1354, 64
    %v1356 = vpop.permute.xlu0 %1355
    %v1357 = vmul.f32 %v1354, %v1356
    %1358 = vrot.lane.b32.xlu0 %v1357, 32
    %v1359 = vpop.permute.xlu0 %1358
    %v1360 = vmul.f32 %v1354, %v1115
    %v1361 = vadd.f32 %v1360, %v1359
    %v1362 = vtanh.pop %v1361
    %v1363 = vmul.f32 %v1356, %v1362
    %1364 = vmatprep.subr.mxu0 0.0
    %1365 = vmatpush1.msra.mxu0 %v252
    %1366 = vmatprep.subr.mxu0 0.0
    %1367 = vmatpush1.msra.mxu0 %v251
    %1368 = vmatprep.subr.mxu0 0.0
    %1369 = vmatpush1.msra.mxu0 %v250
    %1370 = vmatprep.subr.mxu0 0.0
    %1371 = vmatpush1.msra.mxu0 %v249
    %1372 = vmatprep.subr.mxu0 0.0
    %1373 = vmatpush1.msra.mxu0 %v248
    %1374 = vmatprep.subr.mxu0 0.0
    %1375 = vmatpush1.msra.mxu0 %v247
    %1376 = vmatprep.subr.mxu0 0.0
    %1377 = vmatpush1.msra.mxu0 %v246
    %1378 = vmatprep.subr.mxu0 0.0
    %1379 = vmatpush1.msra.mxu0 %v245
    %1380 = vmatprep.subr.mxu0 0.0
    %1381 = vmatpush1.msra.mxu0 %v244
    %1382 = vmatprep.subr.mxu0 0.0
    %1383 = vmatpush1.msra.mxu0 %v243
    %1384 = vmatprep.subr.mxu0 0.0
    %1385 = vmatpush1.msra.mxu0 %v242
    %1386 = vmatprep.subr.mxu0 0.0
    %1387 = vmatpush1.msra.mxu0 %v241
    %1388 = vmatprep.subr.mxu0 0.0
    %1389 = vmatpush1.msra.mxu0 %v240
    %1390 = vmatprep.subr.mxu0 0.0
    %1391 = vmatpush1.msra.mxu0 %v239
    %1392 = vmatprep.subr.mxu0 0.0
    %1393 = vmatpush1.msra.mxu0 %v238
    %1394 = vmatprep.subr.mxu0 0.0
    %1395 = vmatpush1.msra.mxu0 %v237
    %1396 = vmatprep.subr.mxu0 0.0
    %1397 = vmatpush2.msra.mxu0 0.0
    %1398 = vmatprep.subr.mxu0 0.0
    %1399 = vmatpush2.msra.mxu0 0.0
    %1400 = vmatprep.subr.mxu0 0.0
    %1401 = vmatpush2.msra.mxu0 0.0
    %1402 = vmatprep.subr.mxu0 0.0
    %1403 = vmatpush2.msra.mxu0 0.0
    %1404 = vmatprep.subr.mxu0 0.0
    %1405 = vmatpush2.msra.mxu0 0.0
    %1406 = vmatprep.subr.mxu0 0.0
    %1407 = vmatpush2.msra.mxu0 0.0
    %1408 = vmatprep.subr.mxu0 0.0
    %1409 = vmatpush2.msra.mxu0 0.0
    %1410 = vmatprep.subr.mxu0 0.0
    %1411 = vmatpush2.msra.mxu0 0.0
    %1412 = vmatprep.subr.mxu0 0.0
    %1413 = vmatpush2.msra.mxu0 0.0
    %1414 = vmatprep.subr.mxu0 0.0
    %1415 = vmatpush2.msra.mxu0 0.0
    %1416 = vmatprep.subr.mxu0 0.0
    %1417 = vmatpush2.msra.mxu0 0.0
    %1418 = vmatprep.subr.mxu0 0.0
    %1419 = vmatpush2.msra.mxu0 0.0
    %1420 = vmatprep.subr.mxu0 0.0
    %1421 = vmatpush2.msra.mxu0 0.0
    %1422 = vmatprep.subr.mxu0 0.0
    %1423 = vmatpush2.msra.mxu0 0.0
    %1424 = vmatprep.subr.mxu0 0.0
    %1425 = vmatpush2.msra.mxu0 0.0
    %1426 = vmatprep.subr.mxu0 0.0
    %1427 = vmatpush2.msra.mxu0 0.0
    %1428 = vmatprep.mubr.f32.mxu0 0.0
    %1429 = vmatmul.mubr.f32.gmra.mxu0 %v1363
    %v1430 = vpop.f32.mrf.mxu0
    %v1431 = vadd.f32 %v378, %v1430
    %v1432 = vpop.f32.mrf.mxu0
    %1433 = vdwg.mxu0
    %1434 = vmatprep.subr.mxu0 0.0
    %1435 = vmatpush1.msra.mxu0 %v284
    %1436 = vmatprep.subr.mxu0 0.0
    %1437 = vmatpush1.msra.mxu0 %v283
    %1438 = vmatprep.subr.mxu0 0.0
    %1439 = vmatpush1.msra.mxu0 %v282
    %1440 = vmatprep.subr.mxu0 0.0
    %1441 = vmatpush1.msra.mxu0 %v281
    %1442 = vmatprep.subr.mxu0 0.0
    %1443 = vmatpush1.msra.mxu0 %v280
    %1444 = vmatprep.subr.mxu0 0.0
    %1445 = vmatpush1.msra.mxu0 %v279
    %1446 = vmatprep.subr.mxu0 0.0
    %1447 = vmatpush1.msra.mxu0 %v278
    %1448 = vmatprep.subr.mxu0 0.0
    %1449 = vmatpush1.msra.mxu0 %v277
    %1450 = vmatprep.subr.mxu0 0.0
    %1451 = vmatpush1.msra.mxu0 %v276
    %1452 = vmatprep.subr.mxu0 0.0
    %1453 = vmatpush1.msra.mxu0 %v275
    %1454 = vmatprep.subr.mxu0 0.0
    %1455 = vmatpush1.msra.mxu0 %v274
    %1456 = vmatprep.subr.mxu0 0.0
    %1457 = vmatpush1.msra.mxu0 %v273
    %1458 = vmatprep.subr.mxu0 0.0
    %1459 = vmatpush1.msra.mxu0 %v272
    %1460 = vmatprep.subr.mxu0 0.0
    %1461 = vmatpush1.msra.mxu0 %v271
    %1462 = vmatprep.subr.mxu0 0.0
    %1463 = vmatpush1.msra.mxu0 %v270
    %1464 = vmatprep.subr.mxu0 0.0
    %1465 = vmatpush1.msra.mxu0 %v269
    %1466 = vmatprep.subr.mxu0 0.0
    %1467 = vmatpush2.msra.mxu0 0.0
    %1468 = vmatprep.subr.mxu0 0.0
    %1469 = vmatpush2.msra.mxu0 0.0
    %1470 = vmatprep.subr.mxu0 0.0
    %1471 = vmatpush2.msra.mxu0 0.0
    %1472 = vmatprep.subr.mxu0 0.0
    %1473 = vmatpush2.msra.mxu0 0.0
    %1474 = vmatprep.subr.mxu0 0.0
    %1475 = vmatpush2.msra.mxu0 0.0
    %1476 = vmatprep.subr.mxu0 0.0
    %1477 = vmatpush2.msra.mxu0 0.0
    %1478 = vmatprep.subr.mxu0 0.0
    %1479 = vmatpush2.msra.mxu0 0.0
    %1480 = vmatprep.subr.mxu0 0.0
    %1481 = vmatpush2.msra.mxu0 0.0
    %1482 = vmatprep.subr.mxu0 0.0
    %1483 = vmatpush2.msra.mxu0 0.0
    %1484 = vmatprep.subr.mxu0 0.0
    %1485 = vmatpush2.msra.mxu0 0.0
    %1486 = vmatprep.subr.mxu0 0.0
    %1487 = vmatpush2.msra.mxu0 0.0
    %1488 = vmatprep.subr.mxu0 0.0
    %1489 = vmatpush2.msra.mxu0 0.0
    %1490 = vmatprep.subr.mxu0 0.0
    %1491 = vmatpush2.msra.mxu0 0.0
    %1492 = vmatprep.subr.mxu0 0.0
    %1493 = vmatpush2.msra.mxu0 0.0
    %1494 = vmatprep.subr.mxu0 0.0
    %1495 = vmatpush2.msra.mxu0 0.0
    %1496 = vmatprep.subr.mxu0 0.0
    %1497 = vmatpush2.msra.mxu0 0.0
    %1498 = vmatprep.mubr.f32.mxu0 0.0
    %1499 = vmatmul.mubr.f32.gmra.mxu0 %v1275
    %v1500 = vpop.f32.mrf.mxu0
    %v1501 = vadd.f32 0.0, %v1500
    %v1502 = vpop.f32.mrf.mxu0
    %1503 = vdwg.mxu0
    %v1504 = vadd.f32 %v1431, %v1501
    %v1505 = vtanh.pop %v1504
    %v1506 = vxor.u32 %v1504, 2147483648
    %v1507 = vmul.f32 %v1506, 1.442695
    %v1508 = vpow.pop %v1507
    %v1509 = vadd.f32 %v1508, 1.0
    %v1510 = vrcp.pop %v1509
    %v1511 = vmul.f32 1.0, %v1510
    %v1512 = vsel %vm90, %v1505, %v1511
    %1513 = vrot.lane.b32.xlu0 %v1512, 64
    %v1514 = vpop.permute.xlu0 %1513
    %v1515 = vmul.f32 %v1512, %v1514
    %1516 = vrot.lane.b32.xlu0 %v1515, 32
    %v1517 = vpop.permute.xlu0 %1516
    %v1518 = vmul.f32 %v1512, %v1273
    %v1519 = vadd.f32 %v1518, %v1517
    %v1520 = vtanh.pop %v1519
    %v1521 = vmul.f32 %v1514, %v1520
    %1522 = vmatprep.subr.mxu0 0.0
    %1523 = vmatpush1.msra.mxu0 %v268
    %1524 = vmatprep.subr.mxu0 0.0
    %1525 = vmatpush1.msra.mxu0 %v267
    %1526 = vmatprep.subr.mxu0 0.0
    %1527 = vmatpush1.msra.mxu0 %v266
    %1528 = vmatprep.subr.mxu0 0.0
    %1529 = vmatpush1.msra.mxu0 %v265
    %1530 = vmatprep.subr.mxu0 0.0
    %1531 = vmatpush1.msra.mxu0 %v264
    %1532 = vmatprep.subr.mxu0 0.0
    %1533 = vmatpush1.msra.mxu0 %v263
    %1534 = vmatprep.subr.mxu0 0.0
    %1535 = vmatpush1.msra.mxu0 %v262
    %1536 = vmatprep.subr.mxu0 0.0
    %1537 = vmatpush1.msra.mxu0 %v261
    %1538 = vmatprep.subr.mxu0 0.0
    %1539 = vmatpush1.msra.mxu0 %v260
    %1540 = vmatprep.subr.mxu0 0.0
    %1541 = vmatpush1.msra.mxu0 %v259
    %1542 = vmatprep.subr.mxu0 0.0
    %1543 = vmatpush1.msra.mxu0 %v258
    %1544 = vmatprep.subr.mxu0 0.0
    %1545 = vmatpush1.msra.mxu0 %v257
    %1546 = vmatprep.subr.mxu0 0.0
    %1547 = vmatpush1.msra.mxu0 %v256
    %1548 = vmatprep.subr.mxu0 0.0
    %1549 = vmatpush1.msra.mxu0 %v255
    %1550 = vmatprep.subr.mxu0 0.0
    %1551 = vmatpush1.msra.mxu0 %v254
    %1552 = vmatprep.subr.mxu0 0.0
    %1553 = vmatpush1.msra.mxu0 %v253
    %1554 = vmatprep.subr.mxu0 0.0
    %1555 = vmatpush2.msra.mxu0 0.0
    %1556 = vmatprep.subr.mxu0 0.0
    %1557 = vmatpush2.msra.mxu0 0.0
    %1558 = vmatprep.subr.mxu0 0.0
    %1559 = vmatpush2.msra.mxu0 0.0
    %1560 = vmatprep.subr.mxu0 0.0
    %1561 = vmatpush2.msra.mxu0 0.0
    %1562 = vmatprep.subr.mxu0 0.0
    %1563 = vmatpush2.msra.mxu0 0.0
    %1564 = vmatprep.subr.mxu0 0.0
    %1565 = vmatpush2.msra.mxu0 0.0
    %1566 = vmatprep.subr.mxu0 0.0
    %1567 = vmatpush2.msra.mxu0 0.0
    %1568 = vmatprep.subr.mxu0 0.0
    %1569 = vmatpush2.msra.mxu0 0.0
    %1570 = vmatprep.subr.mxu0 0.0
    %1571 = vmatpush2.msra.mxu0 0.0
    %1572 = vmatprep.subr.mxu0 0.0
    %1573 = vmatpush2.msra.mxu0 0.0
    %1574 = vmatprep.subr.mxu0 0.0
    %1575 = vmatpush2.msra.mxu0 0.0
    %1576 = vmatprep.subr.mxu0 0.0
    %1577 = vmatpush2.msra.mxu0 0.0
    %1578 = vmatprep.subr.mxu0 0.0
    %1579 = vmatpush2.msra.mxu0 0.0
    %1580 = vmatprep.subr.mxu0 0.0
    %1581 = vmatpush2.msra.mxu0 0.0
    %1582 = vmatprep.subr.mxu0 0.0
    %1583 = vmatpush2.msra.mxu0 0.0
    %1584 = vmatprep.subr.mxu0 0.0
    %1585 = vmatpush2.msra.mxu0 0.0
    %1586 = vmatprep.mubr.f32.mxu0 0.0
    %1587 = vmatmul.mubr.f32.gmra.mxu0 %v1363
    %v1588 = vpop.f32.mrf.mxu0
    %v1589 = vadd.f32 0.0, %v1588
    %v1590 = vpop.f32.mrf.mxu0
    %1591 = vdwg.mxu0
    %v1592 = vadd.f32 %v224, %v1589
    %v1593 = vtanh.pop %v1592
    %v1594 = vxor.u32 %v1592, 2147483648
    %v1595 = vmul.f32 %v1594, 1.442695
    %v1596 = vpow.pop %v1595
    %v1597 = vadd.f32 %v1596, 1.0
    %v1598 = vrcp.pop %v1597
    %v1599 = vmul.f32 1.0, %v1598
    %v1600 = vsel %vm90, %v1593, %v1599
    %1601 = vrot.lane.b32.xlu0 %v1600, 64
    %v1602 = vpop.permute.xlu0 %1601
    %v1603 = vmul.f32 %v1600, %v1602
    %1604 = vrot.lane.b32.xlu0 %v1603, 32
    %v1605 = vpop.permute.xlu0 %1604
    %v1606 = vmul.f32 %v1600, %v1361
    %v1607 = vadd.f32 %v1606, %v1605
    %v1608 = vtanh.pop %v1607
    %v1609 = vmul.f32 %v1602, %v1608
    %1610 = vmatprep.subr.mxu0 0.0
    %1611 = vmatpush1.msra.mxu0 %v252
    %1612 = vmatprep.subr.mxu0 0.0
    %1613 = vmatpush1.msra.mxu0 %v251
    %1614 = vmatprep.subr.mxu0 0.0
    %1615 = vmatpush1.msra.mxu0 %v250
    %1616 = vmatprep.subr.mxu0 0.0
    %1617 = vmatpush1.msra.mxu0 %v249
    %1618 = vmatprep.subr.mxu0 0.0
    %1619 = vmatpush1.msra.mxu0 %v248
    %1620 = vmatprep.subr.mxu0 0.0
    %1621 = vmatpush1.msra.mxu0 %v247
    %1622 = vmatprep.subr.mxu0 0.0
    %1623 = vmatpush1.msra.mxu0 %v246
    %1624 = vmatprep.subr.mxu0 0.0
    %1625 = vmatpush1.msra.mxu0 %v245
    %1626 = vmatprep.subr.mxu0 0.0
    %1627 = vmatpush1.msra.mxu0 %v244
    %1628 = vmatprep.subr.mxu0 0.0
    %1629 = vmatpush1.msra.mxu0 %v243
    %1630 = vmatprep.subr.mxu0 0.0
    %1631 = vmatpush1.msra.mxu0 %v242
    %1632 = vmatprep.subr.mxu0 0.0
    %1633 = vmatpush1.msra.mxu0 %v241
    %1634 = vmatprep.subr.mxu0 0.0
    %1635 = vmatpush1.msra.mxu0 %v240
    %1636 = vmatprep.subr.mxu0 0.0
    %1637 = vmatpush1.msra.mxu0 %v239
    %1638 = vmatprep.subr.mxu0 0.0
    %1639 = vmatpush1.msra.mxu0 %v238
    %1640 = vmatprep.subr.mxu0 0.0
    %1641 = vmatpush1.msra.mxu0 %v237
    %1642 = vmatprep.subr.mxu0 0.0
    %1643 = vmatpush2.msra.mxu0 0.0
    %1644 = vmatprep.subr.mxu0 0.0
    %1645 = vmatpush2.msra.mxu0 0.0
    %1646 = vmatprep.subr.mxu0 0.0
    %1647 = vmatpush2.msra.mxu0 0.0
    %1648 = vmatprep.subr.mxu0 0.0
    %1649 = vmatpush2.msra.mxu0 0.0
    %1650 = vmatprep.subr.mxu0 0.0
    %1651 = vmatpush2.msra.mxu0 0.0
    %1652 = vmatprep.subr.mxu0 0.0
    %1653 = vmatpush2.msra.mxu0 0.0
    %1654 = vmatprep.subr.mxu0 0.0
    %1655 = vmatpush2.msra.mxu0 0.0
    %1656 = vmatprep.subr.mxu0 0.0
    %1657 = vmatpush2.msra.mxu0 0.0
    %1658 = vmatprep.subr.mxu0 0.0
    %1659 = vmatpush2.msra.mxu0 0.0
    %1660 = vmatprep.subr.mxu0 0.0
    %1661 = vmatpush2.msra.mxu0 0.0
    %1662 = vmatprep.subr.mxu0 0.0
    %1663 = vmatpush2.msra.mxu0 0.0
    %1664 = vmatprep.subr.mxu0 0.0
    %1665 = vmatpush2.msra.mxu0 0.0
    %1666 = vmatprep.subr.mxu0 0.0
    %1667 = vmatpush2.msra.mxu0 0.0
    %1668 = vmatprep.subr.mxu0 0.0
    %1669 = vmatpush2.msra.mxu0 0.0
    %1670 = vmatprep.subr.mxu0 0.0
    %1671 = vmatpush2.msra.mxu0 0.0
    %1672 = vmatprep.subr.mxu0 0.0
    %1673 = vmatpush2.msra.mxu0 0.0
    %1674 = vmatprep.mubr.f32.mxu0 0.0
    %1675 = vmatmul.mubr.f32.gmra.mxu0 %v1609
    %v1676 = vpop.f32.mrf.mxu0
    %v1677 = vadd.f32 %v378, %v1676
    %v1678 = vpop.f32.mrf.mxu0
    %1679 = vdwg.mxu0
    %1680 = vmatprep.subr.mxu0 0.0
    %1681 = vmatpush1.msra.mxu0 %v284
    %1682 = vmatprep.subr.mxu0 0.0
    %1683 = vmatpush1.msra.mxu0 %v283
    %1684 = vmatprep.subr.mxu0 0.0
    %1685 = vmatpush1.msra.mxu0 %v282
    %1686 = vmatprep.subr.mxu0 0.0
    %1687 = vmatpush1.msra.mxu0 %v281
    %1688 = vmatprep.subr.mxu0 0.0
    %1689 = vmatpush1.msra.mxu0 %v280
    %1690 = vmatprep.subr.mxu0 0.0
    %1691 = vmatpush1.msra.mxu0 %v279
    %1692 = vmatprep.subr.mxu0 0.0
    %1693 = vmatpush1.msra.mxu0 %v278
    %1694 = vmatprep.subr.mxu0 0.0
    %1695 = vmatpush1.msra.mxu0 %v277
    %1696 = vmatprep.subr.mxu0 0.0
    %1697 = vmatpush1.msra.mxu0 %v276
    %1698 = vmatprep.subr.mxu0 0.0
    %1699 = vmatpush1.msra.mxu0 %v275
    %1700 = vmatprep.subr.mxu0 0.0
    %1701 = vmatpush1.msra.mxu0 %v274
    %1702 = vmatprep.subr.mxu0 0.0
    %1703 = vmatpush1.msra.mxu0 %v273
    %1704 = vmatprep.subr.mxu0 0.0
    %1705 = vmatpush1.msra.mxu0 %v272
    %1706 = vmatprep.subr.mxu0 0.0
    %1707 = vmatpush1.msra.mxu0 %v271
    %1708 = vmatprep.subr.mxu0 0.0
    %1709 = vmatpush1.msra.mxu0 %v270
    %1710 = vmatprep.subr.mxu0 0.0
    %1711 = vmatpush1.msra.mxu0 %v269
    %1712 = vmatprep.subr.mxu0 0.0
    %1713 = vmatpush2.msra.mxu0 0.0
    %1714 = vmatprep.subr.mxu0 0.0
    %1715 = vmatpush2.msra.mxu0 0.0
    %1716 = vmatprep.subr.mxu0 0.0
    %1717 = vmatpush2.msra.mxu0 0.0
    %1718 = vmatprep.subr.mxu0 0.0
    %1719 = vmatpush2.msra.mxu0 0.0
    %1720 = vmatprep.subr.mxu0 0.0
    %1721 = vmatpush2.msra.mxu0 0.0
    %1722 = vmatprep.subr.mxu0 0.0
    %1723 = vmatpush2.msra.mxu0 0.0
    %1724 = vmatprep.subr.mxu0 0.0
    %1725 = vmatpush2.msra.mxu0 0.0
    %1726 = vmatprep.subr.mxu0 0.0
    %1727 = vmatpush2.msra.mxu0 0.0
    %1728 = vmatprep.subr.mxu0 0.0
    %1729 = vmatpush2.msra.mxu0 0.0
    %1730 = vmatprep.subr.mxu0 0.0
    %1731 = vmatpush2.msra.mxu0 0.0
    %1732 = vmatprep.subr.mxu0 0.0
    %1733 = vmatpush2.msra.mxu0 0.0
    %1734 = vmatprep.subr.mxu0 0.0
    %1735 = vmatpush2.msra.mxu0 0.0
    %1736 = vmatprep.subr.mxu0 0.0
    %1737 = vmatpush2.msra.mxu0 0.0
    %1738 = vmatprep.subr.mxu0 0.0
    %1739 = vmatpush2.msra.mxu0 0.0
    %1740 = vmatprep.subr.mxu0 0.0
    %1741 = vmatpush2.msra.mxu0 0.0
    %1742 = vmatprep.subr.mxu0 0.0
    %1743 = vmatpush2.msra.mxu0 0.0
    %1744 = vmatprep.mubr.f32.mxu0 0.0
    %1745 = vmatmul.mubr.f32.gmra.mxu0 %v1521
    %v1746 = vpop.f32.mrf.mxu0
    %v1747 = vadd.f32 0.0, %v1746
    %v1748 = vpop.f32.mrf.mxu0
    %1749 = vdwg.mxu0
    %v1750 = vadd.f32 %v1677, %v1747
    %v1751 = vtanh.pop %v1750
    %v1752 = vxor.u32 %v1750, 2147483648
    %v1753 = vmul.f32 %v1752, 1.442695
    %v1754 = vpow.pop %v1753
    %v1755 = vadd.f32 %v1754, 1.0
    %v1756 = vrcp.pop %v1755
    %v1757 = vmul.f32 1.0, %v1756
    %v1758 = vsel %vm90, %v1751, %v1757
    %1759 = vrot.lane.b32.xlu0 %v1758, 64
    %v1760 = vpop.permute.xlu0 %1759
    %v1761 = vmul.f32 %v1758, %v1760
    %1762 = vrot.lane.b32.xlu0 %v1761, 32
    %v1763 = vpop.permute.xlu0 %1762
    %v1764 = vmul.f32 %v1758, %v1519
    %v1765 = vadd.f32 %v1764, %v1763
    %v1766 = vtanh.pop %v1765
    %v1767 = vmul.f32 %v1760, %v1766
    %1768 = vmatprep.subr.mxu0 0.0
    %1769 = vmatpush1.msra.mxu0 %v268
    %1770 = vmatprep.subr.mxu0 0.0
    %1771 = vmatpush1.msra.mxu0 %v267
    %1772 = vmatprep.subr.mxu0 0.0
    %1773 = vmatpush1.msra.mxu0 %v266
    %1774 = vmatprep.subr.mxu0 0.0
    %1775 = vmatpush1.msra.mxu0 %v265
    %1776 = vmatprep.subr.mxu0 0.0
    %1777 = vmatpush1.msra.mxu0 %v264
    %1778 = vmatprep.subr.mxu0 0.0
    %1779 = vmatpush1.msra.mxu0 %v263
    %1780 = vmatprep.subr.mxu0 0.0
    %1781 = vmatpush1.msra.mxu0 %v262
    %1782 = vmatprep.subr.mxu0 0.0
    %1783 = vmatpush1.msra.mxu0 %v261
    %1784 = vmatprep.subr.mxu0 0.0
    %1785 = vmatpush1.msra.mxu0 %v260
    %1786 = vmatprep.subr.mxu0 0.0
    %1787 = vmatpush1.msra.mxu0 %v259
    %1788 = vmatprep.subr.mxu0 0.0
    %1789 = vmatpush1.msra.mxu0 %v258
    %1790 = vmatprep.subr.mxu0 0.0
    %1791 = vmatpush1.msra.mxu0 %v257
    %1792 = vmatprep.subr.mxu0 0.0
    %1793 = vmatpush1.msra.mxu0 %v256
    %1794 = vmatprep.subr.mxu0 0.0
    %1795 = vmatpush1.msra.mxu0 %v255
    %1796 = vmatprep.subr.mxu0 0.0
    %1797 = vmatpush1.msra.mxu0 %v254
    %1798 = vmatprep.subr.mxu0 0.0
    %1799 = vmatpush1.msra.mxu0 %v253
    %1800 = vmatprep.subr.mxu0 0.0
    %1801 = vmatpush2.msra.mxu0 0.0
    %1802 = vmatprep.subr.mxu0 0.0
    %1803 = vmatpush2.msra.mxu0 0.0
    %1804 = vmatprep.subr.mxu0 0.0
    %1805 = vmatpush2.msra.mxu0 0.0
    %1806 = vmatprep.subr.mxu0 0.0
    %1807 = vmatpush2.msra.mxu0 0.0
    %1808 = vmatprep.subr.mxu0 0.0
    %1809 = vmatpush2.msra.mxu0 0.0
    %1810 = vmatprep.subr.mxu0 0.0
    %1811 = vmatpush2.msra.mxu0 0.0
    %1812 = vmatprep.subr.mxu0 0.0
    %1813 = vmatpush2.msra.mxu0 0.0
    %1814 = vmatprep.subr.mxu0 0.0
    %1815 = vmatpush2.msra.mxu0 0.0
    %1816 = vmatprep.subr.mxu0 0.0
    %1817 = vmatpush2.msra.mxu0 0.0
    %1818 = vmatprep.subr.mxu0 0.0
    %1819 = vmatpush2.msra.mxu0 0.0
    %1820 = vmatprep.subr.mxu0 0.0
    %1821 = vmatpush2.msra.mxu0 0.0
    %1822 = vmatprep.subr.mxu0 0.0
    %1823 = vmatpush2.msra.mxu0 0.0
    %1824 = vmatprep.subr.mxu0 0.0
    %1825 = vmatpush2.msra.mxu0 0.0
    %1826 = vmatprep.subr.mxu0 0.0
    %1827 = vmatpush2.msra.mxu0 0.0
    %1828 = vmatprep.subr.mxu0 0.0
    %1829 = vmatpush2.msra.mxu0 0.0
    %1830 = vmatprep.subr.mxu0 0.0
    %1831 = vmatpush2.msra.mxu0 0.0
    %1832 = vmatprep.mubr.f32.mxu0 0.0
    %1833 = vmatmul.mubr.f32.gmra.mxu0 %v1609
    %v1834 = vpop.f32.mrf.mxu0
    %v1835 = vadd.f32 0.0, %v1834
    %v1836 = vpop.f32.mrf.mxu0
    %1837 = vdwg.mxu0
    %v1838 = vadd.f32 %v229, %v1835
    %v1839 = vtanh.pop %v1838
    %v1840 = vxor.u32 %v1838, 2147483648
    %v1841 = vmul.f32 %v1840, 1.442695
    %v1842 = vpow.pop %v1841
    %v1843 = vadd.f32 %v1842, 1.0
    %v1844 = vrcp.pop %v1843
    %v1845 = vmul.f32 1.0, %v1844
    %v1846 = vsel %vm90, %v1839, %v1845
    %1847 = vrot.lane.b32.xlu0 %v1846, 64
    %v1848 = vpop.permute.xlu0 %1847
    %v1849 = vmul.f32 %v1846, %v1848
    %1850 = vrot.lane.b32.xlu0 %v1849, 32
    %v1851 = vpop.permute.xlu0 %1850
    %v1852 = vmul.f32 %v1846, %v1607
    %v1853 = vadd.f32 %v1852, %v1851
    %v1854 = vtanh.pop %v1853
    %v1855 = vmul.f32 %v1848, %v1854
    %1856 = vmatprep.subr.mxu0 0.0
    %1857 = vmatpush1.msra.mxu0 %v252
    %1858 = vmatprep.subr.mxu0 0.0
    %1859 = vmatpush1.msra.mxu0 %v251
    %1860 = vmatprep.subr.mxu0 0.0
    %1861 = vmatpush1.msra.mxu0 %v250
    %1862 = vmatprep.subr.mxu0 0.0
    %1863 = vmatpush1.msra.mxu0 %v249
    %1864 = vmatprep.subr.mxu0 0.0
    %1865 = vmatpush1.msra.mxu0 %v248
    %1866 = vmatprep.subr.mxu0 0.0
    %1867 = vmatpush1.msra.mxu0 %v247
    %1868 = vmatprep.subr.mxu0 0.0
    %1869 = vmatpush1.msra.mxu0 %v246
    %1870 = vmatprep.subr.mxu0 0.0
    %1871 = vmatpush1.msra.mxu0 %v245
    %1872 = vmatprep.subr.mxu0 0.0
    %1873 = vmatpush1.msra.mxu0 %v244
    %1874 = vmatprep.subr.mxu0 0.0
    %1875 = vmatpush1.msra.mxu0 %v243
    %1876 = vmatprep.subr.mxu0 0.0
    %1877 = vmatpush1.msra.mxu0 %v242
    %1878 = vmatprep.subr.mxu0 0.0
    %1879 = vmatpush1.msra.mxu0 %v241
    %1880 = vmatprep.subr.mxu0 0.0
    %1881 = vmatpush1.msra.mxu0 %v240
    %1882 = vmatprep.subr.mxu0 0.0
    %1883 = vmatpush1.msra.mxu0 %v239
    %1884 = vmatprep.subr.mxu0 0.0
    %1885 = vmatpush1.msra.mxu0 %v238
    %1886 = vmatprep.subr.mxu0 0.0
    %1887 = vmatpush1.msra.mxu0 %v237
    %1888 = vmatprep.subr.mxu0 0.0
    %1889 = vmatpush2.msra.mxu0 0.0
    %1890 = vmatprep.subr.mxu0 0.0
    %1891 = vmatpush2.msra.mxu0 0.0
    %1892 = vmatprep.subr.mxu0 0.0
    %1893 = vmatpush2.msra.mxu0 0.0
    %1894 = vmatprep.subr.mxu0 0.0
    %1895 = vmatpush2.msra.mxu0 0.0
    %1896 = vmatprep.subr.mxu0 0.0
    %1897 = vmatpush2.msra.mxu0 0.0
    %1898 = vmatprep.subr.mxu0 0.0
    %1899 = vmatpush2.msra.mxu0 0.0
    %1900 = vmatprep.subr.mxu0 0.0
    %1901 = vmatpush2.msra.mxu0 0.0
    %1902 = vmatprep.subr.mxu0 0.0
    %1903 = vmatpush2.msra.mxu0 0.0
    %1904 = vmatprep.subr.mxu0 0.0
    %1905 = vmatpush2.msra.mxu0 0.0
    %1906 = vmatprep.subr.mxu0 0.0
    %1907 = vmatpush2.msra.mxu0 0.0
    %1908 = vmatprep.subr.mxu0 0.0
    %1909 = vmatpush2.msra.mxu0 0.0
    %1910 = vmatprep.subr.mxu0 0.0
    %1911 = vmatpush2.msra.mxu0 0.0
    %1912 = vmatprep.subr.mxu0 0.0
    %1913 = vmatpush2.msra.mxu0 0.0
    %1914 = vmatprep.subr.mxu0 0.0
    %1915 = vmatpush2.msra.mxu0 0.0
    %1916 = vmatprep.subr.mxu0 0.0
    %1917 = vmatpush2.msra.mxu0 0.0
    %1918 = vmatprep.subr.mxu0 0.0
    %1919 = vmatpush2.msra.mxu0 0.0
    %1920 = vmatprep.mubr.f32.mxu0 0.0
    %1921 = vmatmul.mubr.f32.gmra.mxu0 %v1855
    %v1922 = vpop.f32.mrf.mxu0
    %v1923 = vadd.f32 %v378, %v1922
    %v1924 = vpop.f32.mrf.mxu0
    %1925 = vdwg.mxu0
    %1926 = vmatprep.subr.mxu0 0.0
    %1927 = vmatpush1.msra.mxu0 %v284
    %1928 = vmatprep.subr.mxu0 0.0
    %1929 = vmatpush1.msra.mxu0 %v283
    %1930 = vmatprep.subr.mxu0 0.0
    %1931 = vmatpush1.msra.mxu0 %v282
    %1932 = vmatprep.subr.mxu0 0.0
    %1933 = vmatpush1.msra.mxu0 %v281
    %1934 = vmatprep.subr.mxu0 0.0
    %1935 = vmatpush1.msra.mxu0 %v280
    %1936 = vmatprep.subr.mxu0 0.0
    %1937 = vmatpush1.msra.mxu0 %v279
    %1938 = vmatprep.subr.mxu0 0.0
    %1939 = vmatpush1.msra.mxu0 %v278
    %1940 = vmatprep.subr.mxu0 0.0
    %1941 = vmatpush1.msra.mxu0 %v277
    %1942 = vmatprep.subr.mxu0 0.0
    %1943 = vmatpush1.msra.mxu0 %v276
    %1944 = vmatprep.subr.mxu0 0.0
    %1945 = vmatpush1.msra.mxu0 %v275
    %1946 = vmatprep.subr.mxu0 0.0
    %1947 = vmatpush1.msra.mxu0 %v274
    %1948 = vmatprep.subr.mxu0 0.0
    %1949 = vmatpush1.msra.mxu0 %v273
    %1950 = vmatprep.subr.mxu0 0.0
    %1951 = vmatpush1.msra.mxu0 %v272
    %1952 = vmatprep.subr.mxu0 0.0
    %1953 = vmatpush1.msra.mxu0 %v271
    %1954 = vmatprep.subr.mxu0 0.0
    %1955 = vmatpush1.msra.mxu0 %v270
    %1956 = vmatprep.subr.mxu0 0.0
    %1957 = vmatpush1.msra.mxu0 %v269
    %1958 = vmatprep.subr.mxu0 0.0
    %1959 = vmatpush2.msra.mxu0 0.0
    %1960 = vmatprep.subr.mxu0 0.0
    %1961 = vmatpush2.msra.mxu0 0.0
    %1962 = vmatprep.subr.mxu0 0.0
    %1963 = vmatpush2.msra.mxu0 0.0
    %1964 = vmatprep.subr.mxu0 0.0
    %1965 = vmatpush2.msra.mxu0 0.0
    %1966 = vmatprep.subr.mxu0 0.0
    %1967 = vmatpush2.msra.mxu0 0.0
    %1968 = vmatprep.subr.mxu0 0.0
    %1969 = vmatpush2.msra.mxu0 0.0
    %1970 = vmatprep.subr.mxu0 0.0
    %1971 = vmatpush2.msra.mxu0 0.0
    %1972 = vmatprep.subr.mxu0 0.0
    %1973 = vmatpush2.msra.mxu0 0.0
    %1974 = vmatprep.subr.mxu0 0.0
    %1975 = vmatpush2.msra.mxu0 0.0
    %1976 = vmatprep.subr.mxu0 0.0
    %1977 = vmatpush2.msra.mxu0 0.0
    %1978 = vmatprep.subr.mxu0 0.0
    %1979 = vmatpush2.msra.mxu0 0.0
    %1980 = vmatprep.subr.mxu0 0.0
    %1981 = vmatpush2.msra.mxu0 0.0
    %1982 = vmatprep.subr.mxu0 0.0
    %1983 = vmatpush2.msra.mxu0 0.0
    %1984 = vmatprep.subr.mxu0 0.0
    %1985 = vmatpush2.msra.mxu0 0.0
    %1986 = vmatprep.subr.mxu0 0.0
    %1987 = vmatpush2.msra.mxu0 0.0
    %1988 = vmatprep.subr.mxu0 0.0
    %1989 = vmatpush2.msra.mxu0 0.0
    %1990 = vmatprep.mubr.f32.mxu0 0.0
    %1991 = vmatmul.mubr.f32.gmra.mxu0 %v1767
    %v1992 = vpop.f32.mrf.mxu0
    %v1993 = vadd.f32 0.0, %v1992
    %v1994 = vpop.f32.mrf.mxu0
    %1995 = vdwg.mxu0
    %v1996 = vadd.f32 %v1923, %v1993
    %v1997 = vtanh.pop %v1996
    %v1998 = vxor.u32 %v1996, 2147483648
    %v1999 = vmul.f32 %v1998, 1.442695
    %v2000 = vpow.pop %v1999
    %v2001 = vadd.f32 %v2000, 1.0
    %v2002 = vrcp.pop %v2001
    %v2003 = vmul.f32 1.0, %v2002
    %v2004 = vsel %vm90, %v1997, %v2003
    %2005 = vrot.lane.b32.xlu0 %v2004, 64
    %v2006 = vpop.permute.xlu0 %2005
    %v2007 = vmul.f32 %v2004, %v2006
    %2008 = vrot.lane.b32.xlu0 %v2007, 32
    %v2009 = vpop.permute.xlu0 %2008
    %v2010 = vmul.f32 %v2004, %v1765
    %v2011 = vadd.f32 %v2010, %v2009
    %v2012 = vtanh.pop %v2011
    %v2013 = vmul.f32 %v2006, %v2012
    %2014 = vmatprep.subr.mxu0 0.0
    %2015 = vmatpush1.msra.mxu0 %v268
    %2016 = vmatprep.subr.mxu0 0.0
    %2017 = vmatpush1.msra.mxu0 %v267
    %2018 = vmatprep.subr.mxu0 0.0
    %2019 = vmatpush1.msra.mxu0 %v266
    %2020 = vmatprep.subr.mxu0 0.0
    %2021 = vmatpush1.msra.mxu0 %v265
    %2022 = vmatprep.subr.mxu0 0.0
    %2023 = vmatpush1.msra.mxu0 %v264
    %2024 = vmatprep.subr.mxu0 0.0
    %2025 = vmatpush1.msra.mxu0 %v263
    %2026 = vmatprep.subr.mxu0 0.0
    %2027 = vmatpush1.msra.mxu0 %v262
    %2028 = vmatprep.subr.mxu0 0.0
    %2029 = vmatpush1.msra.mxu0 %v261
    %2030 = vmatprep.subr.mxu0 0.0
    %2031 = vmatpush1.msra.mxu0 %v260
    %2032 = vmatprep.subr.mxu0 0.0
    %2033 = vmatpush1.msra.mxu0 %v259
    %2034 = vmatprep.subr.mxu0 0.0
    %2035 = vmatpush1.msra.mxu0 %v258
    %2036 = vmatprep.subr.mxu0 0.0
    %2037 = vmatpush1.msra.mxu0 %v257
    %2038 = vmatprep.subr.mxu0 0.0
    %2039 = vmatpush1.msra.mxu0 %v256
    %2040 = vmatprep.subr.mxu0 0.0
    %2041 = vmatpush1.msra.mxu0 %v255
    %2042 = vmatprep.subr.mxu0 0.0
    %2043 = vmatpush1.msra.mxu0 %v254
    %2044 = vmatprep.subr.mxu0 0.0
    %2045 = vmatpush1.msra.mxu0 %v253
    %2046 = vmatprep.subr.mxu0 0.0
    %2047 = vmatpush2.msra.mxu0 0.0
    %2048 = vmatprep.subr.mxu0 0.0
    %2049 = vmatpush2.msra.mxu0 0.0
    %2050 = vmatprep.subr.mxu0 0.0
    %2051 = vmatpush2.msra.mxu0 0.0
    %2052 = vmatprep.subr.mxu0 0.0
    %2053 = vmatpush2.msra.mxu0 0.0
    %2054 = vmatprep.subr.mxu0 0.0
    %2055 = vmatpush2.msra.mxu0 0.0
    %2056 = vmatprep.subr.mxu0 0.0
    %2057 = vmatpush2.msra.mxu0 0.0
    %2058 = vmatprep.subr.mxu0 0.0
    %2059 = vmatpush2.msra.mxu0 0.0
    %2060 = vmatprep.subr.mxu0 0.0
    %2061 = vmatpush2.msra.mxu0 0.0
    %2062 = vmatprep.subr.mxu0 0.0
    %2063 = vmatpush2.msra.mxu0 0.0
    %2064 = vmatprep.subr.mxu0 0.0
    %2065 = vmatpush2.msra.mxu0 0.0
    %2066 = vmatprep.subr.mxu0 0.0
    %2067 = vmatpush2.msra.mxu0 0.0
    %2068 = vmatprep.subr.mxu0 0.0
    %2069 = vmatpush2.msra.mxu0 0.0
    %2070 = vmatprep.subr.mxu0 0.0
    %2071 = vmatpush2.msra.mxu0 0.0
    %2072 = vmatprep.subr.mxu0 0.0
    %2073 = vmatpush2.msra.mxu0 0.0
    %2074 = vmatprep.subr.mxu0 0.0
    %2075 = vmatpush2.msra.mxu0 0.0
    %2076 = vmatprep.subr.mxu0 0.0
    %2077 = vmatpush2.msra.mxu0 0.0
    %2078 = vmatprep.mubr.f32.mxu0 0.0
    %2079 = vmatmul.mubr.f32.gmra.mxu0 %v1855
    %v2080 = vpop.f32.mrf.mxu0
    %v2081 = vadd.f32 0.0, %v2080
    %v2082 = vpop.f32.mrf.mxu0
    %2083 = vdwg.mxu0
    %v2084 = vadd.f32 %v234, %v2081
    %v2085 = vtanh.pop %v2084
    %v2086 = vxor.u32 %v2084, 2147483648
    %v2087 = vmul.f32 %v2086, 1.442695
    %v2088 = vpow.pop %v2087
    %v2089 = vadd.f32 %v2088, 1.0
    %v2090 = vrcp.pop %v2089
    %v2091 = vmul.f32 1.0, %v2090
    %v2092 = vsel %vm90, %v2085, %v2091
    %2093 = vrot.lane.b32.xlu0 %v2092, 64
    %v2094 = vpop.permute.xlu0 %2093
    %v2095 = vmul.f32 %v2092, %v2094
    %2096 = vrot.lane.b32.xlu0 %v2095, 32
    %v2097 = vpop.permute.xlu0 %2096
    %v2098 = vmul.f32 %v2092, %v1853
    %v2099 = vadd.f32 %v2098, %v2097
    %v2100 = vtanh.pop %v2099
    %v2101 = vmul.f32 %v2094, %v2100
    %2102 = vmatprep.subr.mxu0 0.0
    %2103 = vmatpush1.msra.mxu0 %v252
    %2104 = vmatprep.subr.mxu0 0.0
    %2105 = vmatpush1.msra.mxu0 %v251
    %2106 = vmatprep.subr.mxu0 0.0
    %2107 = vmatpush1.msra.mxu0 %v250
    %2108 = vmatprep.subr.mxu0 0.0
    %2109 = vmatpush1.msra.mxu0 %v249
    %2110 = vmatprep.subr.mxu0 0.0
    %2111 = vmatpush1.msra.mxu0 %v248
    %2112 = vmatprep.subr.mxu0 0.0
    %2113 = vmatpush1.msra.mxu0 %v247
    %2114 = vmatprep.subr.mxu0 0.0
    %2115 = vmatpush1.msra.mxu0 %v246
    %2116 = vmatprep.subr.mxu0 0.0
    %2117 = vmatpush1.msra.mxu0 %v245
    %2118 = vmatprep.subr.mxu0 0.0
    %2119 = vmatpush1.msra.mxu0 %v244
    %2120 = vmatprep.subr.mxu0 0.0
    %2121 = vmatpush1.msra.mxu0 %v243
    %2122 = vmatprep.subr.mxu0 0.0
    %2123 = vmatpush1.msra.mxu0 %v242
    %2124 = vmatprep.subr.mxu0 0.0
    %2125 = vmatpush1.msra.mxu0 %v241
    %2126 = vmatprep.subr.mxu0 0.0
    %2127 = vmatpush1.msra.mxu0 %v240
    %2128 = vmatprep.subr.mxu0 0.0
    %2129 = vmatpush1.msra.mxu0 %v239
    %2130 = vmatprep.subr.mxu0 0.0
    %2131 = vmatpush1.msra.mxu0 %v238
    %2132 = vmatprep.subr.mxu0 0.0
    %2133 = vmatpush1.msra.mxu0 %v237
    %2134 = vmatprep.subr.mxu0 0.0
    %2135 = vmatpush2.msra.mxu0 0.0
    %2136 = vmatprep.subr.mxu0 0.0
    %2137 = vmatpush2.msra.mxu0 0.0
    %2138 = vmatprep.subr.mxu0 0.0
    %2139 = vmatpush2.msra.mxu0 0.0
    %2140 = vmatprep.subr.mxu0 0.0
    %2141 = vmatpush2.msra.mxu0 0.0
    %2142 = vmatprep.subr.mxu0 0.0
    %2143 = vmatpush2.msra.mxu0 0.0
    %2144 = vmatprep.subr.mxu0 0.0
    %2145 = vmatpush2.msra.mxu0 0.0
    %2146 = vmatprep.subr.mxu0 0.0
    %2147 = vmatpush2.msra.mxu0 0.0
    %2148 = vmatprep.subr.mxu0 0.0
    %2149 = vmatpush2.msra.mxu0 0.0
    %2150 = vmatprep.subr.mxu0 0.0
    %2151 = vmatpush2.msra.mxu0 0.0
    %2152 = vmatprep.subr.mxu0 0.0
    %2153 = vmatpush2.msra.mxu0 0.0
    %2154 = vmatprep.subr.mxu0 0.0
    %2155 = vmatpush2.msra.mxu0 0.0
    %2156 = vmatprep.subr.mxu0 0.0
    %2157 = vmatpush2.msra.mxu0 0.0
    %2158 = vmatprep.subr.mxu0 0.0
    %2159 = vmatpush2.msra.mxu0 0.0
    %2160 = vmatprep.subr.mxu0 0.0
    %2161 = vmatpush2.msra.mxu0 0.0
    %2162 = vmatprep.subr.mxu0 0.0
    %2163 = vmatpush2.msra.mxu0 0.0
    %2164 = vmatprep.subr.mxu0 0.0
    %2165 = vmatpush2.msra.mxu0 0.0
    %2166 = vmatprep.mubr.f32.mxu0 0.0
    %2167 = vmatmul.mubr.f32.gmra.mxu0 %v2101
    %v2168 = vpop.f32.mrf.mxu0
    %v2169 = vadd.f32 %v378, %v2168
    %v2170 = vpop.f32.mrf.mxu0
    %2171 = vdwg.mxu0
    %2172 = vmatprep.subr.mxu0 0.0
    %2173 = vmatpush1.msra.mxu0 %v284
    %2174 = vmatprep.subr.mxu0 0.0
    %2175 = vmatpush1.msra.mxu0 %v283
    %2176 = vmatprep.subr.mxu0 0.0
    %2177 = vmatpush1.msra.mxu0 %v282
    %2178 = vmatprep.subr.mxu0 0.0
    %2179 = vmatpush1.msra.mxu0 %v281
    %2180 = vmatprep.subr.mxu0 0.0
    %2181 = vmatpush1.msra.mxu0 %v280
    %2182 = vmatprep.subr.mxu0 0.0
    %2183 = vmatpush1.msra.mxu0 %v279
    %2184 = vmatprep.subr.mxu0 0.0
    %2185 = vmatpush1.msra.mxu0 %v278
    %2186 = vmatprep.subr.mxu0 0.0
    %2187 = vmatpush1.msra.mxu0 %v277
    %2188 = vmatprep.subr.mxu0 0.0
    %2189 = vmatpush1.msra.mxu0 %v276
    %2190 = vmatprep.subr.mxu0 0.0
    %2191 = vmatpush1.msra.mxu0 %v275
    %2192 = vmatprep.subr.mxu0 0.0
    %2193 = vmatpush1.msra.mxu0 %v274
    %2194 = vmatprep.subr.mxu0 0.0
    %2195 = vmatpush1.msra.mxu0 %v273
    %2196 = vmatprep.subr.mxu0 0.0
    %2197 = vmatpush1.msra.mxu0 %v272
    %2198 = vmatprep.subr.mxu0 0.0
    %2199 = vmatpush1.msra.mxu0 %v271
    %2200 = vmatprep.subr.mxu0 0.0
    %2201 = vmatpush1.msra.mxu0 %v270
    %2202 = vmatprep.subr.mxu0 0.0
    %2203 = vmatpush1.msra.mxu0 %v269
    %2204 = vmatprep.subr.mxu0 0.0
    %2205 = vmatpush2.msra.mxu0 0.0
    %2206 = vmatprep.subr.mxu0 0.0
    %2207 = vmatpush2.msra.mxu0 0.0
    %2208 = vmatprep.subr.mxu0 0.0
    %2209 = vmatpush2.msra.mxu0 0.0
    %2210 = vmatprep.subr.mxu0 0.0
    %2211 = vmatpush2.msra.mxu0 0.0
    %2212 = vmatprep.subr.mxu0 0.0
    %2213 = vmatpush2.msra.mxu0 0.0
    %2214 = vmatprep.subr.mxu0 0.0
    %2215 = vmatpush2.msra.mxu0 0.0
    %2216 = vmatprep.subr.mxu0 0.0
    %2217 = vmatpush2.msra.mxu0 0.0
    %2218 = vmatprep.subr.mxu0 0.0
    %2219 = vmatpush2.msra.mxu0 0.0
    %2220 = vmatprep.subr.mxu0 0.0
    %2221 = vmatpush2.msra.mxu0 0.0
    %2222 = vmatprep.subr.mxu0 0.0
    %2223 = vmatpush2.msra.mxu0 0.0
    %2224 = vmatprep.subr.mxu0 0.0
    %2225 = vmatpush2.msra.mxu0 0.0
    %2226 = vmatprep.subr.mxu0 0.0
    %2227 = vmatpush2.msra.mxu0 0.0
    %2228 = vmatprep.subr.mxu0 0.0
    %2229 = vmatpush2.msra.mxu0 0.0
    %2230 = vmatprep.subr.mxu0 0.0
    %2231 = vmatpush2.msra.mxu0 0.0
    %2232 = vmatprep.subr.mxu0 0.0
    %2233 = vmatpush2.msra.mxu0 0.0
    %2234 = vmatprep.subr.mxu0 0.0
    %2235 = vmatpush2.msra.mxu0 0.0
    %2236 = vmatprep.mubr.f32.mxu0 0.0
    %2237 = vmatmul.mubr.f32.gmra.mxu0 %v2013
    %v2238 = vpop.f32.mrf.mxu0
    %v2239 = vadd.f32 0.0, %v2238
    %v2240 = vpop.f32.mrf.mxu0
    %2241 = vdwg.mxu0
    %v2242 = vadd.f32 %v2169, %v2239
    %v2243 = vtanh.pop %v2242
    %v2244 = vxor.u32 %v2242, 2147483648
    %v2245 = vmul.f32 %v2244, 1.442695
    %v2246 = vpow.pop %v2245
    %v2247 = vadd.f32 %v2246, 1.0
    %v2248 = vrcp.pop %v2247
    %v2249 = vmul.f32 1.0, %v2248
    %v2250 = vsel %vm90, %v2243, %v2249
    %2251 = vrot.lane.b32.xlu0 %v2250, 64
    %v2252 = vpop.permute.xlu0 %2251
    %v2253 = vmul.f32 %v2250, %v2252
    %2254 = vrot.lane.b32.xlu0 %v2253, 32
    %v2255 = vpop.permute.xlu0 %2254
    %v2256 = vmul.f32 %v2250, %v2011
    %v2257 = vadd.f32 %v2256, %v2255
    %v2258 = vtanh.pop %v2257
    %v2259 = vmul.f32 %v2252, %v2258
    %v2260 = vld [vmem:[#allocation8] sm:$0xff]
    %v2261 = vld [vmem:[#allocation8 + $0x8] sm:$0xff]
    %v2262 = vld [vmem:[#allocation8 + $0x10] sm:$0xff]
    %v2263 = vld [vmem:[#allocation8 + $0x18] sm:$0xff]
    %v2264 = vld [vmem:[#allocation8 + $0x20] sm:$0xff]
    %v2265 = vld [vmem:[#allocation8 + $0x28] sm:$0xff]
    %v2266 = vld [vmem:[#allocation8 + $0x30] sm:$0xff]
    %v2267 = vld [vmem:[#allocation8 + $0x38] sm:$0xff]
    %v2268 = vld [vmem:[#allocation8 + $0x40] sm:$0xff]
    %v2269 = vld [vmem:[#allocation8 + $0x48] sm:$0xff]
    %v2270 = vld [vmem:[#allocation8 + $0x50] sm:$0xff]
    %v2271 = vld [vmem:[#allocation8 + $0x58] sm:$0xff]
    %v2272 = vld [vmem:[#allocation8 + $0x60] sm:$0xff]
    %v2273 = vld [vmem:[#allocation8 + $0x68] sm:$0xff]
    %v2274 = vld [vmem:[#allocation8 + $0x70] sm:$0xff]
    %v2275 = vld [vmem:[#allocation8 + $0x78] sm:$0xff]
    %v2276 = vld [vmem:[%s8] sm:$0x1]
    %v2278 = vlaneseq
    %v2279 = vshrl.u32 %v2278, 7
    %v2280 = vsub.s32 0, %v2279
    %v2281 = vrot.slane %v2276, %v2280
    %2283 = vmatprep.subr.mxu0 0.0
    %2284 = vmatpush1.msra.mxu0 %v2275
    %2285 = vmatprep.subr.mxu0 0.0
    %2286 = vmatpush1.msra.mxu0 %v2274
    %2287 = vmatprep.subr.mxu0 0.0
    %2288 = vmatpush1.msra.mxu0 %v2273
    %2289 = vmatprep.subr.mxu0 0.0
    %2290 = vmatpush1.msra.mxu0 %v2272
    %2291 = vmatprep.subr.mxu0 0.0
    %2292 = vmatpush1.msra.mxu0 %v2271
    %2293 = vmatprep.subr.mxu0 0.0
    %2294 = vmatpush1.msra.mxu0 %v2270
    %2295 = vmatprep.subr.mxu0 0.0
    %2296 = vmatpush1.msra.mxu0 %v2269
    %2297 = vmatprep.subr.mxu0 0.0
    %2298 = vmatpush1.msra.mxu0 %v2268
    %2299 = vmatprep.subr.mxu0 0.0
    %2300 = vmatpush1.msra.mxu0 %v2267
    %2301 = vmatprep.subr.mxu0 0.0
    %2302 = vmatpush1.msra.mxu0 %v2266
    %2303 = vmatprep.subr.mxu0 0.0
    %2304 = vmatpush1.msra.mxu0 %v2265
    %2305 = vmatprep.subr.mxu0 0.0
    %2306 = vmatpush1.msra.mxu0 %v2264
    %2307 = vmatprep.subr.mxu0 0.0
    %2308 = vmatpush1.msra.mxu0 %v2263
    %2309 = vmatprep.subr.mxu0 0.0
    %2310 = vmatpush1.msra.mxu0 %v2262
    %2311 = vmatprep.subr.mxu0 0.0
    %2312 = vmatpush1.msra.mxu0 %v2261
    %2313 = vmatprep.subr.mxu0 0.0
    %2314 = vmatpush1.msra.mxu0 %v2260
    %2315 = vmatprep.subr.mxu0 0.0
    %2316 = vmatpush2.msra.mxu0 0.0
    %2317 = vmatprep.subr.mxu0 0.0
    %2318 = vmatpush2.msra.mxu0 0.0
    %2319 = vmatprep.subr.mxu0 0.0
    %2320 = vmatpush2.msra.mxu0 0.0
    %2321 = vmatprep.subr.mxu0 0.0
    %2322 = vmatpush2.msra.mxu0 0.0
    %2323 = vmatprep.subr.mxu0 0.0
    %2324 = vmatpush2.msra.mxu0 0.0
    %2325 = vmatprep.subr.mxu0 0.0
    %2326 = vmatpush2.msra.mxu0 0.0
    %2327 = vmatprep.subr.mxu0 0.0
    %2328 = vmatpush2.msra.mxu0 0.0
    %2329 = vmatprep.subr.mxu0 0.0
    %2330 = vmatpush2.msra.mxu0 0.0
    %2331 = vmatprep.subr.mxu0 0.0
    %2332 = vmatpush2.msra.mxu0 0.0
    %2333 = vmatprep.subr.mxu0 0.0
    %2334 = vmatpush2.msra.mxu0 0.0
    %2335 = vmatprep.subr.mxu0 0.0
    %2336 = vmatpush2.msra.mxu0 0.0
    %2337 = vmatprep.subr.mxu0 0.0
    %2338 = vmatpush2.msra.mxu0 0.0
    %2339 = vmatprep.subr.mxu0 0.0
    %2340 = vmatpush2.msra.mxu0 0.0
    %2341 = vmatprep.subr.mxu0 0.0
    %2342 = vmatpush2.msra.mxu0 0.0
    %2343 = vmatprep.subr.mxu0 0.0
    %2344 = vmatpush2.msra.mxu0 0.0
    %2345 = vmatprep.subr.mxu0 0.0
    %2346 = vmatpush2.msra.mxu0 0.0
    %2347 = vmatprep.mubr.f32.mxu0 0.0
    %2348 = vmatmul.mubr.f32.gmra.mxu0 %v2101
    %v2349 = vpop.f32.mrf.mxu0
    %v2350 = vadd.f32 %v2281, %v2349
    %v2351 = vpop.f32.mrf.mxu0
    %2352 = vdwg.mxu0
    %2353 = vst [vmem:[#allocation10] sm:$0xff] %v2350
    %2354 = vmatprep.subr.mxu0 0.0
    %2355 = vmatpush1.msra.mxu0 %v2275
    %2356 = vmatprep.subr.mxu0 0.0
    %2357 = vmatpush1.msra.mxu0 %v2274
    %2358 = vmatprep.subr.mxu0 0.0
    %2359 = vmatpush1.msra.mxu0 %v2273
    %2360 = vmatprep.subr.mxu0 0.0
    %2361 = vmatpush1.msra.mxu0 %v2272
    %2362 = vmatprep.subr.mxu0 0.0
    %2363 = vmatpush1.msra.mxu0 %v2271
    %2364 = vmatprep.subr.mxu0 0.0
    %2365 = vmatpush1.msra.mxu0 %v2270
    %2366 = vmatprep.subr.mxu0 0.0
    %2367 = vmatpush1.msra.mxu0 %v2269
    %2368 = vmatprep.subr.mxu0 0.0
    %2369 = vmatpush1.msra.mxu0 %v2268
    %2370 = vmatprep.subr.mxu0 0.0
    %2371 = vmatpush1.msra.mxu0 %v2267
    %2372 = vmatprep.subr.mxu0 0.0
    %2373 = vmatpush1.msra.mxu0 %v2266
    %2374 = vmatprep.subr.mxu0 0.0
    %2375 = vmatpush1.msra.mxu0 %v2265
    %2376 = vmatprep.subr.mxu0 0.0
    %2377 = vmatpush1.msra.mxu0 %v2264
    %2378 = vmatprep.subr.mxu0 0.0
    %2379 = vmatpush1.msra.mxu0 %v2263
    %2380 = vmatprep.subr.mxu0 0.0
    %2381 = vmatpush1.msra.mxu0 %v2262
    %2382 = vmatprep.subr.mxu0 0.0
    %2383 = vmatpush1.msra.mxu0 %v2261
    %2384 = vmatprep.subr.mxu0 0.0
    %2385 = vmatpush1.msra.mxu0 %v2260
    %2386 = vmatprep.subr.mxu0 0.0
    %2387 = vmatpush2.msra.mxu0 0.0
    %2388 = vmatprep.subr.mxu0 0.0
    %2389 = vmatpush2.msra.mxu0 0.0
    %2390 = vmatprep.subr.mxu0 0.0
    %2391 = vmatpush2.msra.mxu0 0.0
    %2392 = vmatprep.subr.mxu0 0.0
    %2393 = vmatpush2.msra.mxu0 0.0
    %2394 = vmatprep.subr.mxu0 0.0
    %2395 = vmatpush2.msra.mxu0 0.0
    %2396 = vmatprep.subr.mxu0 0.0
    %2397 = vmatpush2.msra.mxu0 0.0
    %2398 = vmatprep.subr.mxu0 0.0
    %2399 = vmatpush2.msra.mxu0 0.0
    %2400 = vmatprep.subr.mxu0 0.0
    %2401 = vmatpush2.msra.mxu0 0.0
    %2402 = vmatprep.subr.mxu0 0.0
    %2403 = vmatpush2.msra.mxu0 0.0
    %2404 = vmatprep.subr.mxu0 0.0
    %2405 = vmatpush2.msra.mxu0 0.0
    %2406 = vmatprep.subr.mxu0 0.0
    %2407 = vmatpush2.msra.mxu0 0.0
    %2408 = vmatprep.subr.mxu0 0.0
    %2409 = vmatpush2.msra.mxu0 0.0
    %2410 = vmatprep.subr.mxu0 0.0
    %2411 = vmatpush2.msra.mxu0 0.0
    %2412 = vmatprep.subr.mxu0 0.0
    %2413 = vmatpush2.msra.mxu0 0.0
    %2414 = vmatprep.subr.mxu0 0.0
    %2415 = vmatpush2.msra.mxu0 0.0
    %2416 = vmatprep.subr.mxu0 0.0
    %2417 = vmatpush2.msra.mxu0 0.0
    %2418 = vmatprep.mubr.f32.mxu0 0.0
    %2419 = vmatmul.mubr.f32.gmra.mxu0 %v2259
    %v2420 = vpop.f32.mrf.mxu0
    %v2421 = vadd.f32 %v2281, %v2420
    %v2422 = vpop.f32.mrf.mxu0
    %2423 = vdwg.mxu0
    %2424 = vst [vmem:[#allocation10 + $0x8] sm:$0xff] %v2421
    // Predicated region
    $region54: #{tpu_custom_call.1} parent=1 // pred_check
      _
    $region55: #{tpu_custom_call.1} parent=1 // pred_check_branch
      %2426 = sbr.rel (0) target = $region57
    $region56: #{tpu_custom_call.1} parent=1 // pred_region
      %s2428 = ssub.s32 256, 256
      %2429 = vsyncadd [#allocation4], %s2428
      %s2430 = sshll.u32 [#allocation10], 4
      %s2431 = int_to_ptr.vmem [resolvable:$true] %s2430
      %2436 = dma.vmem_to_hbm [thread:$0]  %s2431, 256, %s9, [#allocation4], 128, 128, 8
    $region57: #{tpu_custom_call.1} parent=1 // pred_fallthru
      _
    // Predicated region
    $region58: #{tpu_custom_call.1} parent=1 // pred_check
      _
    $region59: #{tpu_custom_call.1} parent=1 // pred_check_branch
      %2438 = sbr.rel (0) target = $region61
    $region60: #{tpu_custom_call.1} parent=1 // pred_region
      %2439 = dma.done [#allocation4], 256
    $region61: #{tpu_custom_call.1} parent=1 // pred_fallthru
      _
    %2440 = vsyncpa [#allocation3], 1
    %2441 = vsyncpa [#allocation6], 1
    %2442 = vsyncpa [#allocation9], 1
    %2443 = vsyncpa [#allocation4], 1

</llo_original>
